<compile_context>
chip_gen: v7x
topology: tpu7x:2x2x1
jax: 0.10.0
libtpu: 0.0.40
codegen_flags: <defaults>
</compile_context>

<pallas_src>
import functools

import jax
import jax.numpy as jnp
import numpy as np
from jax.experimental import pallas as pl
from jax.experimental.pallas import tpu as pltpu  # noqa: F401  (kept for TPU backend)

# Module hyper-parameters (small, consistent with the nn.Module __init__)
D_MODEL = 32
NHEAD = 4
DIM_FF = 64
SEQ = 8
BATCH = 2
EPS = 1e-5  # nn.LayerNorm default


def _layernorm(x, gamma, beta):
    mean = jnp.mean(x, axis=-1, keepdims=True)
    var = jnp.mean((x - mean) ** 2, axis=-1, keepdims=True)
    return (x - mean) * jax.lax.rsqrt(var + EPS) * gamma + beta


def encoder_layer_kernel(src_ref, pos_ref,
                         wqk_ref, bqk_ref, wv_ref, bv_ref,
                         wo_ref, bo_ref,
                         g1_ref, be1_ref, g2_ref, be2_ref,
                         w1_ref, b1_ref, w2_ref, b2_ref,
                         out_ref, *, batch, seq, nhead):
    # Single grid step: refs hold full arrays. Rows are (b, s) flattened: B*S x D.
    D = src_ref.shape[-1]
    hd = D // nhead

    x = src_ref[...]                       # (B*S, D)
    qk_in = x + pos_ref[...]               # with_pos_embed for q and k

    # Packed q|k projection (weights pre-transposed; 1/sqrt(hd) folded into Wq/bq)
    qk = jnp.dot(qk_in, wqk_ref[...], preferred_element_type=jnp.float32) + bqk_ref[...]
    v = jnp.dot(x, wv_ref[...], preferred_element_type=jnp.float32) + bv_ref[...]

    wo = wo_ref[...]                       # (D, D), already transposed

    # Per-head attention, batched over B inside each einsum (static loop over heads).
    attn_acc = None
    for h in range(nhead):
        sl = slice(h * hd, (h + 1) * hd)
        qh = qk[:, sl].reshape(batch, seq, hd)                       # (B, S, hd)
        kh = qk[:, D + h * hd:D + (h + 1) * hd].reshape(batch, seq, hd)
        vh = v[:, sl].reshape(batch, seq, hd)
        s = jnp.einsum('bqd,bkd->bqk', qh, kh,
                       preferred_element_type=jnp.float32)           # (B, S, S)
        s = s - jnp.max(s, axis=-1, keepdims=True)
        e = jnp.exp(s)
        p = e * pl.reciprocal(jnp.sum(e, axis=-1, keepdims=True), approx=False)
        ctx = jnp.einsum('bqk,bkd->bqd', p, vh,
                         preferred_element_type=jnp.float32)          # (B, S, hd)
        # Accumulate per-head block of the output projection (avoids lane concat):
        part = jnp.dot(ctx.reshape(batch * seq, hd), wo[sl, :],
                       preferred_element_type=jnp.float32)            # (B*S, D)
        attn_acc = part if attn_acc is None else attn_acc + part

    attn_out = attn_acc + bo_ref[...]

    # residual + LayerNorm1   (dropout1 is identity in eval)
    x1 = _layernorm(x + attn_out, g1_ref[...], be1_ref[...])

    # feed-forward: linear2(relu(linear1(x1)))   (dropout is identity in eval)
    h1 = jnp.dot(x1, w1_ref[...], preferred_element_type=jnp.float32) + b1_ref[...]
    h1 = jnp.maximum(h1, 0.0)
    ff = jnp.dot(h1, w2_ref[...], preferred_element_type=jnp.float32) + b2_ref[...]

    # residual + LayerNorm2   (dropout2 is identity in eval)
    out = _layernorm(x1 + ff, g2_ref[...], be2_ref[...])
    out_ref[...] = out.astype(out_ref.dtype)


def transformer_encoder_layer(src_sbd, pos_sbd, params):
    """src_sbd, pos_sbd: (S, B, D) float32 (PyTorch seq-first convention)."""
    S, B, D = src_sbd.shape
    hd = D // NHEAD
    scale = 1.0 / float(hd) ** 0.5

    # Fold batch into rows: (S, B, D) -> (B, S, D) -> (B*S, D)
    src = jnp.transpose(src_sbd, (1, 0, 2)).reshape(B * S, D)
    pos = jnp.transpose(pos_sbd, (1, 0, 2)).reshape(B * S, D)

    # One-time weight transforms outside the kernel:
    #   pre-transpose everything, fold attention scale into Wq/bq, pack Wq|Wk.
    wqk_t = jnp.concatenate([params["wq"].T * scale, params["wk"].T], axis=1)  # (D, 2D)
    bqk = jnp.concatenate([params["bq"] * scale, params["bk"]], axis=1)        # (1, 2D)

    kernel = functools.partial(encoder_layer_kernel, batch=B, seq=S, nhead=NHEAD)

    # Single grid step: no grid / no BlockSpecs -> every operand is a full-array
    # VMEM block (total footprint is only a few tens of KiB).
    out2d = pl.pallas_call(
        kernel,
        out_shape=jax.ShapeDtypeStruct((B * S, D), src_sbd.dtype),
    )(src, pos,
      wqk_t, bqk,
      params["wv"].T, params["bv"],
      params["wo"].T, params["bo"],
      params["g1"], params["be1"], params["g2"], params["be2"],
      params["w1"].T, params["b1"], params["w2"].T, params["b2"])

    return jnp.transpose(out2d.reshape(B, S, D), (1, 0, 2))  # back to (S, B, D)


def reference_jax(src_sbd, pos_sbd, params):
    """Pure-JAX reference mirroring PyTorch forward_post (eval mode)."""
    src = jnp.transpose(src_sbd, (1, 0, 2))
    pos = jnp.transpose(pos_sbd, (1, 0, 2))
    B, S, D = src.shape
    hd = D // NHEAD
    qk = src + pos
    q = qk @ params["wq"].T + params["bq"][0]
    k = qk @ params["wk"].T + params["bk"][0]
    v = src @ params["wv"].T + params["bv"][0]
    qh = q.reshape(B, S, NHEAD, hd).transpose(0, 2, 1, 3)
    kh = k.reshape(B, S, NHEAD, hd).transpose(0, 2, 1, 3)
    vh = v.reshape(B, S, NHEAD, hd).transpose(0, 2, 1, 3)
    scores = jnp.einsum("bhqd,bhkd->bhqk", qh, kh) / jnp.sqrt(float(hd))
    attn = jax.nn.softmax(scores, axis=-1)
    o = jnp.einsum("bhqk,bhkd->bhqd", attn, vh).transpose(0, 2, 1, 3).reshape(B, S, D)
    o = o @ params["wo"].T + params["bo"][0]

    def ln(x, g, b):
        m = x.mean(-1, keepdims=True)
        vv = ((x - m) ** 2).mean(-1, keepdims=True)
        return (x - m) / jnp.sqrt(vv + EPS) * g[0] + b[0]

    x1 = ln(src + o, params["g1"], params["be1"])
    ff = jnp.maximum(x1 @ params["w1"].T + params["b1"][0], 0.0) @ params["w2"].T + params["b2"][0]
    out = ln(x1 + ff, params["g2"], params["be2"])
    return jnp.transpose(out, (1, 0, 2))


def init_params(key):
    ks = jax.random.split(key, 12)
    s = 0.1
    return {
        "wq": jax.random.normal(ks[0], (D_MODEL, D_MODEL), jnp.float32) * s,
        "wk": jax.random.normal(ks[1], (D_MODEL, D_MODEL), jnp.float32) * s,
        "wv": jax.random.normal(ks[2], (D_MODEL, D_MODEL), jnp.float32) * s,
        "bq": jax.random.normal(ks[3], (1, D_MODEL), jnp.float32) * s,
        "bk": jax.random.normal(ks[4], (1, D_MODEL), jnp.float32) * s,
        "bv": jax.random.normal(ks[5], (1, D_MODEL), jnp.float32) * s,
        "wo": jax.random.normal(ks[6], (D_MODEL, D_MODEL), jnp.float32) * s,
        "bo": jax.random.normal(ks[7], (1, D_MODEL), jnp.float32) * s,
        "g1": jnp.ones((1, D_MODEL), jnp.float32),
        "be1": jnp.zeros((1, D_MODEL), jnp.float32),
        "g2": jnp.ones((1, D_MODEL), jnp.float32),
        "be2": jnp.zeros((1, D_MODEL), jnp.float32),
        "w1": jax.random.normal(ks[8], (DIM_FF, D_MODEL), jnp.float32) * s,
        "b1": jax.random.normal(ks[9], (1, DIM_FF), jnp.float32) * s,
        "w2": jax.random.normal(ks[10], (D_MODEL, DIM_FF), jnp.float32) * s,
        "b2": jax.random.normal(ks[11], (1, D_MODEL), jnp.float32) * s,
    }


if __name__ == "__main__":
    key = jax.random.PRNGKey(0)
    k_src, k_pos, k_par = jax.random.split(key, 3)
    src = jax.random.normal(k_src, (SEQ, BATCH, D_MODEL), jnp.float32)
    pos = jax.random.normal(k_pos, (SEQ, BATCH, D_MODEL), jnp.float32)
    params = init_params(k_par)

    out = jax.jit(transformer_encoder_layer)(src, pos, params)
    out = jax.block_until_ready(out)

    ref = reference_jax(src, pos, params)
    np.testing.assert_allclose(np.asarray(out), np.asarray(ref), rtol=1e-4, atol=1e-4)

    print("KERNEL_OK")
</pallas_src>

<mosaic_0001>
module attributes {stable_mosaic.version = 11 : i64} {
  func.func @encoder_layer_kernel(%arg0: memref<16x32xf32, #tpu.memory_space<vmem>>, %arg1: memref<16x32xf32, #tpu.memory_space<vmem>>, %arg2: memref<32x64xf32, #tpu.memory_space<vmem>>, %arg3: memref<1x64xf32, #tpu.memory_space<vmem>>, %arg4: memref<32x32xf32, #tpu.memory_space<vmem>>, %arg5: memref<1x32xf32, #tpu.memory_space<vmem>>, %arg6: memref<32x32xf32, #tpu.memory_space<vmem>>, %arg7: memref<1x32xf32, #tpu.memory_space<vmem>>, %arg8: memref<1x32xf32, #tpu.memory_space<vmem>>, %arg9: memref<1x32xf32, #tpu.memory_space<vmem>>, %arg10: memref<1x32xf32, #tpu.memory_space<vmem>>, %arg11: memref<1x32xf32, #tpu.memory_space<vmem>>, %arg12: memref<32x64xf32, #tpu.memory_space<vmem>>, %arg13: memref<1x64xf32, #tpu.memory_space<vmem>>, %arg14: memref<64x32xf32, #tpu.memory_space<vmem>>, %arg15: memref<1x32xf32, #tpu.memory_space<vmem>>, %arg16: memref<16x32xf32, #tpu.memory_space<vmem>>) attributes {dimension_semantics = [], scalar_prefetch = 0 : i64, scratch_operands = 0 : i64, tpu.core_type = #tpu.core_type<tc>} {
    %c0 = arith.constant 0 : index
    %c0_0 = arith.constant 0 : index
    %0 = vector.load %arg0[%c0, %c0_0] : memref<16x32xf32, #tpu.memory_space<vmem>>, vector<16x32xf32>
    %c0_1 = arith.constant 0 : index
    %c0_2 = arith.constant 0 : index
    %1 = vector.load %arg1[%c0_1, %c0_2] : memref<16x32xf32, #tpu.memory_space<vmem>>, vector<16x32xf32>
    %2 = arith.addf %0, %1 : vector<16x32xf32>
    %c0_3 = arith.constant 0 : index
    %c0_4 = arith.constant 0 : index
    %3 = vector.load %arg2[%c0_3, %c0_4] : memref<32x64xf32, #tpu.memory_space<vmem>>, vector<32x64xf32>
    %cst = arith.constant dense<0.000000e+00> : vector<16x64xf32>
    %4 = tpu.matmul %2, %3, %cst {dimension_numbers = #tpu.dot_dimension_numbers<[1], [0], [0], [1], [0, 0, 1, 1], [], []>} : vector<16x32xf32>, vector<32x64xf32>, vector<16x64xf32> -> vector<16x64xf32>
    %c0_5 = arith.constant 0 : index
    %c0_6 = arith.constant 0 : index
    %5 = vector.load %arg3[%c0_5, %c0_6] : memref<1x64xf32, #tpu.memory_space<vmem>>, vector<1x64xf32>
    %6 = vector.broadcast %5 : vector<1x64xf32> to vector<16x64xf32>
    %7 = arith.addf %4, %6 : vector<16x64xf32>
    %c0_7 = arith.constant 0 : index
    %c0_8 = arith.constant 0 : index
    %8 = vector.load %arg4[%c0_7, %c0_8] : memref<32x32xf32, #tpu.memory_space<vmem>>, vector<32x32xf32>
    %cst_9 = arith.constant dense<0.000000e+00> : vector<16x32xf32>
    %9 = tpu.matmul %0, %8, %cst_9 {dimension_numbers = #tpu.dot_dimension_numbers<[1], [0], [0], [1], [0, 0, 1, 1], [], []>} : vector<16x32xf32>, vector<32x32xf32>, vector<16x32xf32> -> vector<16x32xf32>
    %c0_10 = arith.constant 0 : index
    %c0_11 = arith.constant 0 : index
    %10 = vector.load %arg5[%c0_10, %c0_11] : memref<1x32xf32, #tpu.memory_space<vmem>>, vector<1x32xf32>
    %11 = vector.broadcast %10 : vector<1x32xf32> to vector<16x32xf32>
    %12 = arith.addf %9, %11 : vector<16x32xf32>
    %c0_12 = arith.constant 0 : index
    %c0_13 = arith.constant 0 : index
    %13 = vector.load %arg6[%c0_12, %c0_13] : memref<32x32xf32, #tpu.memory_space<vmem>>, vector<32x32xf32>
    %14 = vector.extract_strided_slice %7 {offsets = [0, 0], sizes = [16, 8], strides = [1, 1]} : vector<16x64xf32> to vector<16x8xf32>
    %15 = vector.shape_cast %14 : vector<16x8xf32> to vector<2x8x8xf32>
    %16 = vector.extract_strided_slice %7 {offsets = [0, 32], sizes = [16, 8], strides = [1, 1]} : vector<16x64xf32> to vector<16x8xf32>
    %17 = vector.shape_cast %16 : vector<16x8xf32> to vector<2x8x8xf32>
    %18 = vector.extract_strided_slice %12 {offsets = [0, 0], sizes = [16, 8], strides = [1, 1]} : vector<16x32xf32> to vector<16x8xf32>
    %19 = vector.shape_cast %18 : vector<16x8xf32> to vector<2x8x8xf32>
    "tpu.trace_start"() <{level = 10 : i32, message = "bqd,bkd->bqk"}> : () -> ()
    %cst_14 = arith.constant dense<0.000000e+00> : vector<2x8x8xf32>
    %20 = tpu.matmul %15, %17, %cst_14 {dimension_numbers = #tpu.dot_dimension_numbers<[2], [2], [1], [1], [0, 0, 0, 1, 1, 1], [0], [0]>} : vector<2x8x8xf32>, vector<2x8x8xf32>, vector<2x8x8xf32> -> vector<2x8x8xf32>
    "tpu.trace_stop"() : () -> ()
    %cst_15 = arith.constant dense<0xFF800000> : vector<2x8xf32>
    %21 = vector.multi_reduction <maximumf>, %20, %cst_15 [2] : vector<2x8x8xf32> to vector<2x8xf32>
    %22 = vector.shape_cast %21 : vector<2x8xf32> to vector<2x8x1xf32>
    %23 = vector.broadcast %22 : vector<2x8x1xf32> to vector<2x8x8xf32>
    %24 = arith.subf %20, %23 : vector<2x8x8xf32>
    %25 = math.exp %24 : vector<2x8x8xf32>
    %cst_16 = arith.constant dense<0.000000e+00> : vector<2x8xf32>
    %26 = vector.multi_reduction <add>, %25, %cst_16 [2] : vector<2x8x8xf32> to vector<2x8xf32>
    %27 = vector.shape_cast %26 : vector<2x8xf32> to vector<2x8x1xf32>
    %28 = tpu.reciprocal %27 : vector<2x8x1xf32> -> vector<2x8x1xf32>
    %29 = vector.broadcast %28 : vector<2x8x1xf32> to vector<2x8x8xf32>
    %30 = arith.mulf %25, %29 : vector<2x8x8xf32>
    "tpu.trace_start"() <{level = 10 : i32, message = "bqk,bkd->bqd"}> : () -> ()
    %cst_17 = arith.constant dense<0.000000e+00> : vector<2x8x8xf32>
    %31 = tpu.matmul %30, %19, %cst_17 {dimension_numbers = #tpu.dot_dimension_numbers<[2], [1], [1], [2], [0, 0, 0, 1, 1, 2], [0], [0]>} : vector<2x8x8xf32>, vector<2x8x8xf32>, vector<2x8x8xf32> -> vector<2x8x8xf32>
    "tpu.trace_stop"() : () -> ()
    %32 = vector.shape_cast %31 : vector<2x8x8xf32> to vector<16x8xf32>
    %33 = vector.extract_strided_slice %13 {offsets = [0, 0], sizes = [8, 32], strides = [1, 1]} : vector<32x32xf32> to vector<8x32xf32>
    %cst_18 = arith.constant dense<0.000000e+00> : vector<16x32xf32>
    %34 = tpu.matmul %32, %33, %cst_18 {dimension_numbers = #tpu.dot_dimension_numbers<[1], [0], [0], [1], [0, 0, 1, 1], [], []>} : vector<16x8xf32>, vector<8x32xf32>, vector<16x32xf32> -> vector<16x32xf32>
    %35 = vector.extract_strided_slice %7 {offsets = [0, 8], sizes = [16, 8], strides = [1, 1]} : vector<16x64xf32> to vector<16x8xf32>
    %36 = vector.shape_cast %35 : vector<16x8xf32> to vector<2x8x8xf32>
    %37 = vector.extract_strided_slice %7 {offsets = [0, 40], sizes = [16, 8], strides = [1, 1]} : vector<16x64xf32> to vector<16x8xf32>
    %38 = vector.shape_cast %37 : vector<16x8xf32> to vector<2x8x8xf32>
    %39 = vector.extract_strided_slice %12 {offsets = [0, 8], sizes = [16, 8], strides = [1, 1]} : vector<16x32xf32> to vector<16x8xf32>
    %40 = vector.shape_cast %39 : vector<16x8xf32> to vector<2x8x8xf32>
    "tpu.trace_start"() <{level = 10 : i32, message = "bqd,bkd->bqk"}> : () -> ()
    %cst_19 = arith.constant dense<0.000000e+00> : vector<2x8x8xf32>
    %41 = tpu.matmul %36, %38, %cst_19 {dimension_numbers = #tpu.dot_dimension_numbers<[2], [2], [1], [1], [0, 0, 0, 1, 1, 1], [0], [0]>} : vector<2x8x8xf32>, vector<2x8x8xf32>, vector<2x8x8xf32> -> vector<2x8x8xf32>
    "tpu.trace_stop"() : () -> ()
    %cst_20 = arith.constant dense<0xFF800000> : vector<2x8xf32>
    %42 = vector.multi_reduction <maximumf>, %41, %cst_20 [2] : vector<2x8x8xf32> to vector<2x8xf32>
    %43 = vector.shape_cast %42 : vector<2x8xf32> to vector<2x8x1xf32>
    %44 = vector.broadcast %43 : vector<2x8x1xf32> to vector<2x8x8xf32>
    %45 = arith.subf %41, %44 : vector<2x8x8xf32>
    %46 = math.exp %45 : vector<2x8x8xf32>
    %cst_21 = arith.constant dense<0.000000e+00> : vector<2x8xf32>
    %47 = vector.multi_reduction <add>, %46, %cst_21 [2] : vector<2x8x8xf32> to vector<2x8xf32>
    %48 = vector.shape_cast %47 : vector<2x8xf32> to vector<2x8x1xf32>
    %49 = tpu.reciprocal %48 : vector<2x8x1xf32> -> vector<2x8x1xf32>
    %50 = vector.broadcast %49 : vector<2x8x1xf32> to vector<2x8x8xf32>
    %51 = arith.mulf %46, %50 : vector<2x8x8xf32>
    "tpu.trace_start"() <{level = 10 : i32, message = "bqk,bkd->bqd"}> : () -> ()
    %cst_22 = arith.constant dense<0.000000e+00> : vector<2x8x8xf32>
    %52 = tpu.matmul %51, %40, %cst_22 {dimension_numbers = #tpu.dot_dimension_numbers<[2], [1], [1], [2], [0, 0, 0, 1, 1, 2], [0], [0]>} : vector<2x8x8xf32>, vector<2x8x8xf32>, vector<2x8x8xf32> -> vector<2x8x8xf32>
    "tpu.trace_stop"() : () -> ()
    %53 = vector.shape_cast %52 : vector<2x8x8xf32> to vector<16x8xf32>
    %54 = vector.extract_strided_slice %13 {offsets = [8, 0], sizes = [8, 32], strides = [1, 1]} : vector<32x32xf32> to vector<8x32xf32>
    %cst_23 = arith.constant dense<0.000000e+00> : vector<16x32xf32>
    %55 = tpu.matmul %53, %54, %cst_23 {dimension_numbers = #tpu.dot_dimension_numbers<[1], [0], [0], [1], [0, 0, 1, 1], [], []>} : vector<16x8xf32>, vector<8x32xf32>, vector<16x32xf32> -> vector<16x32xf32>
    %56 = arith.addf %34, %55 : vector<16x32xf32>
    %57 = vector.extract_strided_slice %7 {offsets = [0, 16], sizes = [16, 8], strides = [1, 1]} : vector<16x64xf32> to vector<16x8xf32>
    %58 = vector.shape_cast %57 : vector<16x8xf32> to vector<2x8x8xf32>
    %59 = vector.extract_strided_slice %7 {offsets = [0, 48], sizes = [16, 8], strides = [1, 1]} : vector<16x64xf32> to vector<16x8xf32>
    %60 = vector.shape_cast %59 : vector<16x8xf32> to vector<2x8x8xf32>
    %61 = vector.extract_strided_slice %12 {offsets = [0, 16], sizes = [16, 8], strides = [1, 1]} : vector<16x32xf32> to vector<16x8xf32>
    %62 = vector.shape_cast %61 : vector<16x8xf32> to vector<2x8x8xf32>
    "tpu.trace_start"() <{level = 10 : i32, message = "bqd,bkd->bqk"}> : () -> ()
    %cst_24 = arith.constant dense<0.000000e+00> : vector<2x8x8xf32>
    %63 = tpu.matmul %58, %60, %cst_24 {dimension_numbers = #tpu.dot_dimension_numbers<[2], [2], [1], [1], [0, 0, 0, 1, 1, 1], [0], [0]>} : vector<2x8x8xf32>, vector<2x8x8xf32>, vector<2x8x8xf32> -> vector<2x8x8xf32>
    "tpu.trace_stop"() : () -> ()
    %cst_25 = arith.constant dense<0xFF800000> : vector<2x8xf32>
    %64 = vector.multi_reduction <maximumf>, %63, %cst_25 [2] : vector<2x8x8xf32> to vector<2x8xf32>
    %65 = vector.shape_cast %64 : vector<2x8xf32> to vector<2x8x1xf32>
    %66 = vector.broadcast %65 : vector<2x8x1xf32> to vector<2x8x8xf32>
    %67 = arith.subf %63, %66 : vector<2x8x8xf32>
    %68 = math.exp %67 : vector<2x8x8xf32>
    %cst_26 = arith.constant dense<0.000000e+00> : vector<2x8xf32>
    %69 = vector.multi_reduction <add>, %68, %cst_26 [2] : vector<2x8x8xf32> to vector<2x8xf32>
    %70 = vector.shape_cast %69 : vector<2x8xf32> to vector<2x8x1xf32>
    %71 = tpu.reciprocal %70 : vector<2x8x1xf32> -> vector<2x8x1xf32>
    %72 = vector.broadcast %71 : vector<2x8x1xf32> to vector<2x8x8xf32>
    %73 = arith.mulf %68, %72 : vector<2x8x8xf32>
    "tpu.trace_start"() <{level = 10 : i32, message = "bqk,bkd->bqd"}> : () -> ()
    %cst_27 = arith.constant dense<0.000000e+00> : vector<2x8x8xf32>
    %74 = tpu.matmul %73, %62, %cst_27 {dimension_numbers = #tpu.dot_dimension_numbers<[2], [1], [1], [2], [0, 0, 0, 1, 1, 2], [0], [0]>} : vector<2x8x8xf32>, vector<2x8x8xf32>, vector<2x8x8xf32> -> vector<2x8x8xf32>
    "tpu.trace_stop"() : () -> ()
    %75 = vector.shape_cast %74 : vector<2x8x8xf32> to vector<16x8xf32>
    %76 = vector.extract_strided_slice %13 {offsets = [16, 0], sizes = [8, 32], strides = [1, 1]} : vector<32x32xf32> to vector<8x32xf32>
    %cst_28 = arith.constant dense<0.000000e+00> : vector<16x32xf32>
    %77 = tpu.matmul %75, %76, %cst_28 {dimension_numbers = #tpu.dot_dimension_numbers<[1], [0], [0], [1], [0, 0, 1, 1], [], []>} : vector<16x8xf32>, vector<8x32xf32>, vector<16x32xf32> -> vector<16x32xf32>
    %78 = arith.addf %56, %77 : vector<16x32xf32>
    %79 = vector.extract_strided_slice %7 {offsets = [0, 24], sizes = [16, 8], strides = [1, 1]} : vector<16x64xf32> to vector<16x8xf32>
    %80 = vector.shape_cast %79 : vector<16x8xf32> to vector<2x8x8xf32>
    %81 = vector.extract_strided_slice %7 {offsets = [0, 56], sizes = [16, 8], strides = [1, 1]} : vector<16x64xf32> to vector<16x8xf32>
    %82 = vector.shape_cast %81 : vector<16x8xf32> to vector<2x8x8xf32>
    %83 = vector.extract_strided_slice %12 {offsets = [0, 24], sizes = [16, 8], strides = [1, 1]} : vector<16x32xf32> to vector<16x8xf32>
    %84 = vector.shape_cast %83 : vector<16x8xf32> to vector<2x8x8xf32>
    "tpu.trace_start"() <{level = 10 : i32, message = "bqd,bkd->bqk"}> : () -> ()
    %cst_29 = arith.constant dense<0.000000e+00> : vector<2x8x8xf32>
    %85 = tpu.matmul %80, %82, %cst_29 {dimension_numbers = #tpu.dot_dimension_numbers<[2], [2], [1], [1], [0, 0, 0, 1, 1, 1], [0], [0]>} : vector<2x8x8xf32>, vector<2x8x8xf32>, vector<2x8x8xf32> -> vector<2x8x8xf32>
    "tpu.trace_stop"() : () -> ()
    %cst_30 = arith.constant dense<0xFF800000> : vector<2x8xf32>
    %86 = vector.multi_reduction <maximumf>, %85, %cst_30 [2] : vector<2x8x8xf32> to vector<2x8xf32>
    %87 = vector.shape_cast %86 : vector<2x8xf32> to vector<2x8x1xf32>
    %88 = vector.broadcast %87 : vector<2x8x1xf32> to vector<2x8x8xf32>
    %89 = arith.subf %85, %88 : vector<2x8x8xf32>
    %90 = math.exp %89 : vector<2x8x8xf32>
    %cst_31 = arith.constant dense<0.000000e+00> : vector<2x8xf32>
    %91 = vector.multi_reduction <add>, %90, %cst_31 [2] : vector<2x8x8xf32> to vector<2x8xf32>
    %92 = vector.shape_cast %91 : vector<2x8xf32> to vector<2x8x1xf32>
    %93 = tpu.reciprocal %92 : vector<2x8x1xf32> -> vector<2x8x1xf32>
    %94 = vector.broadcast %93 : vector<2x8x1xf32> to vector<2x8x8xf32>
    %95 = arith.mulf %90, %94 : vector<2x8x8xf32>
    "tpu.trace_start"() <{level = 10 : i32, message = "bqk,bkd->bqd"}> : () -> ()
    %cst_32 = arith.constant dense<0.000000e+00> : vector<2x8x8xf32>
    %96 = tpu.matmul %95, %84, %cst_32 {dimension_numbers = #tpu.dot_dimension_numbers<[2], [1], [1], [2], [0, 0, 0, 1, 1, 2], [0], [0]>} : vector<2x8x8xf32>, vector<2x8x8xf32>, vector<2x8x8xf32> -> vector<2x8x8xf32>
    "tpu.trace_stop"() : () -> ()
    %97 = vector.shape_cast %96 : vector<2x8x8xf32> to vector<16x8xf32>
    %98 = vector.extract_strided_slice %13 {offsets = [24, 0], sizes = [8, 32], strides = [1, 1]} : vector<32x32xf32> to vector<8x32xf32>
    %cst_33 = arith.constant dense<0.000000e+00> : vector<16x32xf32>
    %99 = tpu.matmul %97, %98, %cst_33 {dimension_numbers = #tpu.dot_dimension_numbers<[1], [0], [0], [1], [0, 0, 1, 1], [], []>} : vector<16x8xf32>, vector<8x32xf32>, vector<16x32xf32> -> vector<16x32xf32>
    %100 = arith.addf %78, %99 : vector<16x32xf32>
    %c0_34 = arith.constant 0 : index
    %c0_35 = arith.constant 0 : index
    %101 = vector.load %arg7[%c0_34, %c0_35] : memref<1x32xf32, #tpu.memory_space<vmem>>, vector<1x32xf32>
    %102 = vector.broadcast %101 : vector<1x32xf32> to vector<16x32xf32>
    %103 = arith.addf %100, %102 : vector<16x32xf32>
    %104 = arith.addf %0, %103 : vector<16x32xf32>
    %c0_36 = arith.constant 0 : index
    %c0_37 = arith.constant 0 : index
    %105 = vector.load %arg8[%c0_36, %c0_37] : memref<1x32xf32, #tpu.memory_space<vmem>>, vector<1x32xf32>
    %c0_38 = arith.constant 0 : index
    %c0_39 = arith.constant 0 : index
    %106 = vector.load %arg9[%c0_38, %c0_39] : memref<1x32xf32, #tpu.memory_space<vmem>>, vector<1x32xf32>
    %cst_40 = arith.constant dense<0.000000e+00> : vector<16xf32>
    %107 = vector.multi_reduction <add>, %104, %cst_40 [1] : vector<16x32xf32> to vector<16xf32>
    %108 = vector.shape_cast %107 : vector<16xf32> to vector<16x1xf32>
    %cst_41 = arith.constant 3.200000e+01 : f32
    %109 = vector.broadcast %cst_41 : f32 to vector<16x1xf32>
    %110 = arith.divf %108, %109 : vector<16x1xf32>
    %111 = vector.broadcast %110 : vector<16x1xf32> to vector<16x32xf32>
    %112 = arith.subf %104, %111 : vector<16x32xf32>
    %113 = arith.mulf %112, %112 : vector<16x32xf32>
    %cst_42 = arith.constant dense<0.000000e+00> : vector<16xf32>
    %114 = vector.multi_reduction <add>, %113, %cst_42 [1] : vector<16x32xf32> to vector<16xf32>
    %115 = vector.shape_cast %114 : vector<16xf32> to vector<16x1xf32>
    %cst_43 = arith.constant 3.200000e+01 : f32
    %116 = vector.broadcast %cst_43 : f32 to vector<16x1xf32>
    %117 = arith.divf %115, %116 : vector<16x1xf32>
    %118 = vector.broadcast %110 : vector<16x1xf32> to vector<16x32xf32>
    %119 = arith.subf %104, %118 : vector<16x32xf32>
    %cst_44 = arith.constant 9.99999974E-6 : f32
    %120 = vector.broadcast %cst_44 : f32 to vector<16x1xf32>
    %121 = arith.addf %117, %120 : vector<16x1xf32>
    %122 = math.rsqrt %121 : vector<16x1xf32>
    %123 = vector.broadcast %122 : vector<16x1xf32> to vector<16x32xf32>
    %124 = arith.mulf %119, %123 : vector<16x32xf32>
    %125 = vector.broadcast %105 : vector<1x32xf32> to vector<16x32xf32>
    %126 = arith.mulf %124, %125 : vector<16x32xf32>
    %127 = vector.broadcast %106 : vector<1x32xf32> to vector<16x32xf32>
    %128 = arith.addf %126, %127 : vector<16x32xf32>
    %c0_45 = arith.constant 0 : index
    %c0_46 = arith.constant 0 : index
    %129 = vector.load %arg12[%c0_45, %c0_46] : memref<32x64xf32, #tpu.memory_space<vmem>>, vector<32x64xf32>
    %cst_47 = arith.constant dense<0.000000e+00> : vector<16x64xf32>
    %130 = tpu.matmul %128, %129, %cst_47 {dimension_numbers = #tpu.dot_dimension_numbers<[1], [0], [0], [1], [0, 0, 1, 1], [], []>} : vector<16x32xf32>, vector<32x64xf32>, vector<16x64xf32> -> vector<16x64xf32>
    %c0_48 = arith.constant 0 : index
    %c0_49 = arith.constant 0 : index
    %131 = vector.load %arg13[%c0_48, %c0_49] : memref<1x64xf32, #tpu.memory_space<vmem>>, vector<1x64xf32>
    %132 = vector.broadcast %131 : vector<1x64xf32> to vector<16x64xf32>
    %133 = arith.addf %130, %132 : vector<16x64xf32>
    %cst_50 = arith.constant 0.000000e+00 : f32
    %134 = vector.broadcast %cst_50 : f32 to vector<16x64xf32>
    %135 = arith.maximumf %133, %134 : vector<16x64xf32>
    %c0_51 = arith.constant 0 : index
    %c0_52 = arith.constant 0 : index
    %136 = vector.load %arg14[%c0_51, %c0_52] : memref<64x32xf32, #tpu.memory_space<vmem>>, vector<64x32xf32>
    %cst_53 = arith.constant dense<0.000000e+00> : vector<16x32xf32>
    %137 = tpu.matmul %135, %136, %cst_53 {dimension_numbers = #tpu.dot_dimension_numbers<[1], [0], [0], [1], [0, 0, 1, 1], [], []>} : vector<16x64xf32>, vector<64x32xf32>, vector<16x32xf32> -> vector<16x32xf32>
    %c0_54 = arith.constant 0 : index
    %c0_55 = arith.constant 0 : index
    %138 = vector.load %arg15[%c0_54, %c0_55] : memref<1x32xf32, #tpu.memory_space<vmem>>, vector<1x32xf32>
    %139 = vector.broadcast %138 : vector<1x32xf32> to vector<16x32xf32>
    %140 = arith.addf %137, %139 : vector<16x32xf32>
    %141 = arith.addf %128, %140 : vector<16x32xf32>
    %c0_56 = arith.constant 0 : index
    %c0_57 = arith.constant 0 : index
    %142 = vector.load %arg10[%c0_56, %c0_57] : memref<1x32xf32, #tpu.memory_space<vmem>>, vector<1x32xf32>
    %c0_58 = arith.constant 0 : index
    %c0_59 = arith.constant 0 : index
    %143 = vector.load %arg11[%c0_58, %c0_59] : memref<1x32xf32, #tpu.memory_space<vmem>>, vector<1x32xf32>
    %cst_60 = arith.constant dense<0.000000e+00> : vector<16xf32>
    %144 = vector.multi_reduction <add>, %141, %cst_60 [1] : vector<16x32xf32> to vector<16xf32>
    %145 = vector.shape_cast %144 : vector<16xf32> to vector<16x1xf32>
    %cst_61 = arith.constant 3.200000e+01 : f32
    %146 = vector.broadcast %cst_61 : f32 to vector<16x1xf32>
    %147 = arith.divf %145, %146 : vector<16x1xf32>
    %148 = vector.broadcast %147 : vector<16x1xf32> to vector<16x32xf32>
    %149 = arith.subf %141, %148 : vector<16x32xf32>
    %150 = arith.mulf %149, %149 : vector<16x32xf32>
    %cst_62 = arith.constant dense<0.000000e+00> : vector<16xf32>
    %151 = vector.multi_reduction <add>, %150, %cst_62 [1] : vector<16x32xf32> to vector<16xf32>
    %152 = vector.shape_cast %151 : vector<16xf32> to vector<16x1xf32>
    %cst_63 = arith.constant 3.200000e+01 : f32
    %153 = vector.broadcast %cst_63 : f32 to vector<16x1xf32>
    %154 = arith.divf %152, %153 : vector<16x1xf32>
    %155 = vector.broadcast %147 : vector<16x1xf32> to vector<16x32xf32>
    %156 = arith.subf %141, %155 : vector<16x32xf32>
    %cst_64 = arith.constant 9.99999974E-6 : f32
    %157 = vector.broadcast %cst_64 : f32 to vector<16x1xf32>
    %158 = arith.addf %154, %157 : vector<16x1xf32>
    %159 = math.rsqrt %158 : vector<16x1xf32>
    %160 = vector.broadcast %159 : vector<16x1xf32> to vector<16x32xf32>
    %161 = arith.mulf %156, %160 : vector<16x32xf32>
    %162 = vector.broadcast %142 : vector<1x32xf32> to vector<16x32xf32>
    %163 = arith.mulf %161, %162 : vector<16x32xf32>
    %164 = vector.broadcast %143 : vector<1x32xf32> to vector<16x32xf32>
    %165 = arith.addf %163, %164 : vector<16x32xf32>
    %c0_65 = arith.constant 0 : index
    %c0_66 = arith.constant 0 : index
    %166 = vector.load %arg16[%c0_65, %c0_66] : memref<16x32xf32, #tpu.memory_space<vmem>>, vector<16x32xf32>
    tpu.vector_store %arg16[%c0_65, %c0_66], %165 {strides = array<i32>} : memref<16x32xf32, #tpu.memory_space<vmem>>, vector<16x32xf32>,
    return
  }
}

</mosaic_0001>

<llo_original>
// kernel: transformer_encoder_layer.1
$region0: #{transformer_encoder_layer.1}
  #allocation0 [shape = 'u32[]', space=smem, size = 0x4, offset = 0x4, fixed_abs, tag = 'smem constant byte address 0x4 - core index']
  #allocation1 [shape = 'u32[144,128]{1,0:T(1,128)}', space=vmem, size = 0x12000, scoped, tag = 'internal scratch']
  %s0 = inlined_call_operand.vmem [shape: f32[16,32], index: 0, kind: input, shape index: {}]
  %s1 = inlined_call_operand.vmem [shape: f32[16,32], index: 1, kind: input, shape index: {}]
  %s2 = inlined_call_operand.vmem [shape: f32[32,64], index: 2, kind: input, shape index: {}]
  %s3 = inlined_call_operand.vmem [shape: f32[1,64], index: 3, kind: input, shape index: {}]
  %s4 = inlined_call_operand.vmem [shape: f32[32,32], index: 4, kind: input, shape index: {}]
  %s5 = inlined_call_operand.vmem [shape: f32[1,32], index: 5, kind: input, shape index: {}]
  %s6 = inlined_call_operand.vmem [shape: f32[32,32], index: 6, kind: input, shape index: {}]
  %s7 = inlined_call_operand.vmem [shape: f32[1,32], index: 7, kind: input, shape index: {}]
  %s8 = inlined_call_operand.vmem [shape: f32[1,32], index: 8, kind: input, shape index: {}]
  %s9 = inlined_call_operand.vmem [shape: f32[1,32], index: 9, kind: input, shape index: {}]
  %s10 = inlined_call_operand.vmem [shape: f32[1,32], index: 10, kind: input, shape index: {}]
  %s11 = inlined_call_operand.vmem [shape: f32[1,32], index: 11, kind: input, shape index: {}]
  %s12 = inlined_call_operand.vmem [shape: f32[32,64], index: 12, kind: input, shape index: {}]
  %s13 = inlined_call_operand.vmem [shape: f32[1,64], index: 13, kind: input, shape index: {}]
  %s14 = inlined_call_operand.vmem [shape: f32[64,32], index: 14, kind: input, shape index: {}]
  %s15 = inlined_call_operand.vmem [shape: f32[1,32], index: 15, kind: input, shape index: {}]
  %s16 = inlined_call_operand.vmem [shape: f32[16,32], index: 16, kind: output, shape index: {}]
  %s17 = sld [smem:[#allocation0]]
  $region74: #{transformer_encoder_layer.1} parent=0
    _
  %s19 = ssub.s32 1, %s17
  %s20 = scalar_select 0, %s19, %s17
  // Predicated region
  $region2: #{transformer_encoder_layer.1} parent=0 // pred_check
    _
  $region3: #{transformer_encoder_layer.1} parent=0 // pred_check_branch
    %22 = sbr.rel (0) target = $region5
  $region4: #{transformer_encoder_layer.1} parent=0 // pred_region
    _
  $region5: #{transformer_encoder_layer.1} parent=0 // pred_fallthru
    _
  // Predicated region
  $region6: #{transformer_encoder_layer.1} parent=0 // pred_check
    _
  $region7: #{transformer_encoder_layer.1} parent=0 // pred_check_branch
    %24 = sbr.rel (0) target = $region9
  $region8: #{transformer_encoder_layer.1} parent=0 // pred_region
    _
  $region9: #{transformer_encoder_layer.1} parent=0 // pred_fallthru
    _
  // Predicated region
  $region10: #{transformer_encoder_layer.1} parent=0 // pred_check
    _
  $region11: #{transformer_encoder_layer.1} parent=0 // pred_check_branch
    %26 = sbr.rel (0) target = $region13
  $region12: #{transformer_encoder_layer.1} parent=0 // pred_region
    _
  $region13: #{transformer_encoder_layer.1} parent=0 // pred_fallthru
    _
  // Predicated region
  $region14: #{transformer_encoder_layer.1} parent=0 // pred_check
    _
  $region15: #{transformer_encoder_layer.1} parent=0 // pred_check_branch
    %28 = sbr.rel (0) target = $region17
  $region16: #{transformer_encoder_layer.1} parent=0 // pred_region
    _
  $region17: #{transformer_encoder_layer.1} parent=0 // pred_fallthru
    _
  // Predicated region
  $region18: #{transformer_encoder_layer.1} parent=0 // pred_check
    _
  $region19: #{transformer_encoder_layer.1} parent=0 // pred_check_branch
    %30 = sbr.rel (0) target = $region21
  $region20: #{transformer_encoder_layer.1} parent=0 // pred_region
    _
  $region21: #{transformer_encoder_layer.1} parent=0 // pred_fallthru
    _
  // Predicated region
  $region22: #{transformer_encoder_layer.1} parent=0 // pred_check
    _
  $region23: #{transformer_encoder_layer.1} parent=0 // pred_check_branch
    %32 = sbr.rel (0) target = $region25
  $region24: #{transformer_encoder_layer.1} parent=0 // pred_region
    _
  $region25: #{transformer_encoder_layer.1} parent=0 // pred_fallthru
    _
  // Predicated region
  $region26: #{transformer_encoder_layer.1} parent=0 // pred_check
    _
  $region27: #{transformer_encoder_layer.1} parent=0 // pred_check_branch
    %34 = sbr.rel (0) target = $region29
  $region28: #{transformer_encoder_layer.1} parent=0 // pred_region
    _
  $region29: #{transformer_encoder_layer.1} parent=0 // pred_fallthru
    _
  // Predicated region
  $region30: #{transformer_encoder_layer.1} parent=0 // pred_check
    _
  $region31: #{transformer_encoder_layer.1} parent=0 // pred_check_branch
    %36 = sbr.rel (0) target = $region33
  $region32: #{transformer_encoder_layer.1} parent=0 // pred_region
    _
  $region33: #{transformer_encoder_layer.1} parent=0 // pred_fallthru
    _
  // Predicated region
  $region34: #{transformer_encoder_layer.1} parent=0 // pred_check
    _
  $region35: #{transformer_encoder_layer.1} parent=0 // pred_check_branch
    %38 = sbr.rel (0) target = $region37
  $region36: #{transformer_encoder_layer.1} parent=0 // pred_region
    _
  $region37: #{transformer_encoder_layer.1} parent=0 // pred_fallthru
    _
  // Predicated region
  $region38: #{transformer_encoder_layer.1} parent=0 // pred_check
    _
  $region39: #{transformer_encoder_layer.1} parent=0 // pred_check_branch
    %40 = sbr.rel (0) target = $region41
  $region40: #{transformer_encoder_layer.1} parent=0 // pred_region
    _
  $region41: #{transformer_encoder_layer.1} parent=0 // pred_fallthru
    _
  // Predicated region
  $region42: #{transformer_encoder_layer.1} parent=0 // pred_check
    _
  $region43: #{transformer_encoder_layer.1} parent=0 // pred_check_branch
    %42 = sbr.rel (0) target = $region45
  $region44: #{transformer_encoder_layer.1} parent=0 // pred_region
    _
  $region45: #{transformer_encoder_layer.1} parent=0 // pred_fallthru
    _
  // Predicated region
  $region46: #{transformer_encoder_layer.1} parent=0 // pred_check
    _
  $region47: #{transformer_encoder_layer.1} parent=0 // pred_check_branch
    %44 = sbr.rel (0) target = $region49
  $region48: #{transformer_encoder_layer.1} parent=0 // pred_region
    _
  $region49: #{transformer_encoder_layer.1} parent=0 // pred_fallthru
    _
  // Predicated region
  $region50: #{transformer_encoder_layer.1} parent=0 // pred_check
    _
  $region51: #{transformer_encoder_layer.1} parent=0 // pred_check_branch
    %46 = sbr.rel (0) target = $region53
  $region52: #{transformer_encoder_layer.1} parent=0 // pred_region
    _
  $region53: #{transformer_encoder_layer.1} parent=0 // pred_fallthru
    _
  // Predicated region
  $region54: #{transformer_encoder_layer.1} parent=0 // pred_check
    _
  $region55: #{transformer_encoder_layer.1} parent=0 // pred_check_branch
    %48 = sbr.rel (0) target = $region57
  $region56: #{transformer_encoder_layer.1} parent=0 // pred_region
    _
  $region57: #{transformer_encoder_layer.1} parent=0 // pred_fallthru
    _
  // Predicated region
  $region58: #{transformer_encoder_layer.1} parent=0 // pred_check
    _
  $region59: #{transformer_encoder_layer.1} parent=0 // pred_check_branch
    %50 = sbr.rel (0) target = $region61
  $region60: #{transformer_encoder_layer.1} parent=0 // pred_region
    _
  $region61: #{transformer_encoder_layer.1} parent=0 // pred_fallthru
    _
  // Predicated region
  $region62: #{transformer_encoder_layer.1} parent=0 // pred_check
    _
  $region63: #{transformer_encoder_layer.1} parent=0 // pred_check_branch
    %52 = sbr.rel (0) target = $region65
  $region64: #{transformer_encoder_layer.1} parent=0 // pred_region
    _
  $region65: #{transformer_encoder_layer.1} parent=0 // pred_fallthru
    _
  %v53 = vld [vmem:[%s0] sm:$0xff]
  %v54 = vld [vmem:[%s0 + $0x8] sm:$0xff]
  %v55 = vld [vmem:[%s1] sm:$0xff]
  %v56 = vld [vmem:[%s1 + $0x8] sm:$0xff]
  %v57 = vadd.f32 %v53, %v55
  %v58 = vadd.f32 %v54, %v56
  %v59 = vld [vmem:[%s2] sm:$0xff]
  %v60 = vld [vmem:[%s2 + $0x8] sm:$0xff]
  %v61 = vld [vmem:[%s2 + $0x10] sm:$0xff]
  %v62 = vld [vmem:[%s2 + $0x18] sm:$0xff]
  %v63 = vld [vmem:[%s3] sm:$0x1]
  %v65 = vlaneseq
  %v66 = vshrl.u32 %v65, 7
  %v67 = vsub.s32 0, %v66
  %v68 = vrot.slane %v63, %v67
  %vm70 = vcmask 261120
  %v72 = vsel %vm70, %v57, 0
  %v75 = vsel %vm70, %v58, 0
  %77 = vmatprep.subr.mxu0 0.0
  %78 = vmatpush1.msra.mxu0 %v59
  %79 = vmatprep.subr.mxu0 0.0
  %80 = vmatpush1.msra.mxu0 %v60
  %81 = vmatprep.subr.mxu0 0.0
  %82 = vmatpush1.msra.mxu0 %v61
  %83 = vmatprep.subr.mxu0 0.0
  %84 = vmatpush1.msra.mxu0 %v62
  %85 = vmatprep.subr.mxu0 0.0
  %86 = vmatpush1.msra.mxu0 0.0
  %87 = vmatprep.subr.mxu0 0.0
  %88 = vmatpush1.msra.mxu0 0.0
  %89 = vmatprep.subr.mxu0 0.0
  %90 = vmatpush1.msra.mxu0 0.0
  %91 = vmatprep.subr.mxu0 0.0
  %92 = vmatpush1.msra.mxu0 0.0
  %93 = vmatprep.subr.mxu0 0.0
  %94 = vmatpush1.msra.mxu0 0.0
  %95 = vmatprep.subr.mxu0 0.0
  %96 = vmatpush1.msra.mxu0 0.0
  %97 = vmatprep.subr.mxu0 0.0
  %98 = vmatpush1.msra.mxu0 0.0
  %99 = vmatprep.subr.mxu0 0.0
  %100 = vmatpush1.msra.mxu0 0.0
  %101 = vmatprep.subr.mxu0 0.0
  %102 = vmatpush1.msra.mxu0 0.0
  %103 = vmatprep.subr.mxu0 0.0
  %104 = vmatpush1.msra.mxu0 0.0
  %105 = vmatprep.subr.mxu0 0.0
  %106 = vmatpush1.msra.mxu0 0.0
  %107 = vmatprep.subr.mxu0 0.0
  %108 = vmatpush1.msra.mxu0 0.0
  %109 = vmatprep.subr.mxu0 0.0
  %110 = vmatpush1.msra.mxu0 0.0
  %111 = vmatprep.subr.mxu0 0.0
  %112 = vmatpush1.msra.mxu0 0.0
  %113 = vmatprep.subr.mxu0 0.0
  %114 = vmatpush1.msra.mxu0 0.0
  %115 = vmatprep.subr.mxu0 0.0
  %116 = vmatpush1.msra.mxu0 0.0
  %117 = vmatprep.subr.mxu0 0.0
  %118 = vmatpush1.msra.mxu0 0.0
  %119 = vmatprep.subr.mxu0 0.0
  %120 = vmatpush1.msra.mxu0 0.0
  %121 = vmatprep.subr.mxu0 0.0
  %122 = vmatpush1.msra.mxu0 0.0
  %123 = vmatprep.subr.mxu0 0.0
  %124 = vmatpush1.msra.mxu0 0.0
  %125 = vmatprep.subr.mxu0 0.0
  %126 = vmatpush1.msra.mxu0 0.0
  %127 = vmatprep.subr.mxu0 0.0
  %128 = vmatpush1.msra.mxu0 0.0
  %129 = vmatprep.subr.mxu0 0.0
  %130 = vmatpush1.msra.mxu0 0.0
  %131 = vmatprep.subr.mxu0 0.0
  %132 = vmatpush1.msra.mxu0 0.0
  %133 = vmatprep.subr.mxu0 0.0
  %134 = vmatpush1.msra.mxu0 0.0
  %135 = vmatprep.subr.mxu0 0.0
  %136 = vmatpush1.msra.mxu0 0.0
  %137 = vmatprep.subr.mxu0 0.0
  %138 = vmatpush1.msra.mxu0 0.0
  %139 = vmatprep.subr.mxu0 0.0
  %140 = vmatpush1.msra.mxu0 0.0
  %141 = vmatprep.mubr.f32.mxu0 0.0
  %142 = vmatmul.mubr.f32.gmra.mrb[0].mxu0 %v72
  %v143 = vpop.f32.mrb[0].mxu0
  %v144 = vadd.f32 %v68, %v143
  %v145 = vpop.f32.mrb[0].mxu0
  %146 = vmatprep.mubr.f32.mxu0 0.0
  %147 = vmatmul.mubr.f32.gmra.mrb[0].mxu0 %v75
  %v148 = vpop.f32.mrb[0].mxu0
  %v149 = vadd.f32 %v68, %v148
  %v150 = vpop.f32.mrb[0].mxu0
  %151 = vdwg.mxu0
  %v152 = vld [vmem:[%s4] sm:$0xff]
  %v153 = vld [vmem:[%s4 + $0x8] sm:$0xff]
  %v154 = vld [vmem:[%s4 + $0x10] sm:$0xff]
  %v155 = vld [vmem:[%s4 + $0x18] sm:$0xff]
  %v156 = vld [vmem:[%s5] sm:$0x1]
  %v158 = vlaneseq
  %v159 = vshrl.u32 %v158, 7
  %v160 = vsub.s32 0, %v159
  %v161 = vrot.slane %v156, %v160
  %v164 = vsel %vm70, %v53, 0
  %v167 = vsel %vm70, %v54, 0
  %169 = vmatprep.subr.mxu0 0.0
  %170 = vmatpush1.msra.mxu0 %v152
  %171 = vmatprep.subr.mxu0 0.0
  %172 = vmatpush1.msra.mxu0 %v153
  %173 = vmatprep.subr.mxu0 0.0
  %174 = vmatpush1.msra.mxu0 %v154
  %175 = vmatprep.subr.mxu0 0.0
  %176 = vmatpush1.msra.mxu0 %v155
  %177 = vmatprep.subr.mxu0 0.0
  %178 = vmatpush1.msra.mxu0 0.0
  %179 = vmatprep.subr.mxu0 0.0
  %180 = vmatpush1.msra.mxu0 0.0
  %181 = vmatprep.subr.mxu0 0.0
  %182 = vmatpush1.msra.mxu0 0.0
  %183 = vmatprep.subr.mxu0 0.0
  %184 = vmatpush1.msra.mxu0 0.0
  %185 = vmatprep.subr.mxu0 0.0
  %186 = vmatpush1.msra.mxu0 0.0
  %187 = vmatprep.subr.mxu0 0.0
  %188 = vmatpush1.msra.mxu0 0.0
  %189 = vmatprep.subr.mxu0 0.0
  %190 = vmatpush1.msra.mxu0 0.0
  %191 = vmatprep.subr.mxu0 0.0
  %192 = vmatpush1.msra.mxu0 0.0
  %193 = vmatprep.subr.mxu0 0.0
  %194 = vmatpush1.msra.mxu0 0.0
  %195 = vmatprep.subr.mxu0 0.0
  %196 = vmatpush1.msra.mxu0 0.0
  %197 = vmatprep.subr.mxu0 0.0
  %198 = vmatpush1.msra.mxu0 0.0
  %199 = vmatprep.subr.mxu0 0.0
  %200 = vmatpush1.msra.mxu0 0.0
  %201 = vmatprep.subr.mxu0 0.0
  %202 = vmatpush1.msra.mxu0 0.0
  %203 = vmatprep.subr.mxu0 0.0
  %204 = vmatpush1.msra.mxu0 0.0
  %205 = vmatprep.subr.mxu0 0.0
  %206 = vmatpush1.msra.mxu0 0.0
  %207 = vmatprep.subr.mxu0 0.0
  %208 = vmatpush1.msra.mxu0 0.0
  %209 = vmatprep.subr.mxu0 0.0
  %210 = vmatpush1.msra.mxu0 0.0
  %211 = vmatprep.subr.mxu0 0.0
  %212 = vmatpush1.msra.mxu0 0.0
  %213 = vmatprep.subr.mxu0 0.0
  %214 = vmatpush1.msra.mxu0 0.0
  %215 = vmatprep.subr.mxu0 0.0
  %216 = vmatpush1.msra.mxu0 0.0
  %217 = vmatprep.subr.mxu0 0.0
  %218 = vmatpush1.msra.mxu0 0.0
  %219 = vmatprep.subr.mxu0 0.0
  %220 = vmatpush1.msra.mxu0 0.0
  %221 = vmatprep.subr.mxu0 0.0
  %222 = vmatpush1.msra.mxu0 0.0
  %223 = vmatprep.subr.mxu0 0.0
  %224 = vmatpush1.msra.mxu0 0.0
  %225 = vmatprep.subr.mxu0 0.0
  %226 = vmatpush1.msra.mxu0 0.0
  %227 = vmatprep.subr.mxu0 0.0
  %228 = vmatpush1.msra.mxu0 0.0
  %229 = vmatprep.subr.mxu0 0.0
  %230 = vmatpush1.msra.mxu0 0.0
  %231 = vmatprep.subr.mxu0 0.0
  %232 = vmatpush1.msra.mxu0 0.0
  %233 = vmatprep.mubr.f32.mxu0 0.0
  %234 = vmatmul.mubr.f32.gmra.mrb[0].mxu0 %v164
  %v235 = vpop.f32.mrb[0].mxu0
  %v236 = vadd.f32 %v161, %v235
  %v237 = vpop.f32.mrb[0].mxu0
  %238 = vmatprep.mubr.f32.mxu0 0.0
  %239 = vmatmul.mubr.f32.gmra.mrb[0].mxu0 %v167
  %v240 = vpop.f32.mrb[0].mxu0
  %v241 = vadd.f32 %v161, %v240
  %v242 = vpop.f32.mrb[0].mxu0
  %243 = vdwg.mxu0
  %v244 = vld [vmem:[%s6] sm:$0xff]
  %v245 = vld [vmem:[%s6 + $0x8] sm:$0xff]
  %v246 = vld [vmem:[%s6 + $0x10] sm:$0xff]
  %v247 = vld [vmem:[%s6 + $0x18] sm:$0xff]
  %249 = vrot.lane.b32.xlu0 %v144, 96
  %v250 = vpop.permute.xlu0 %249
  %vm251 = vcmask 64512
  %v252 = vsel %vm251, %v144, 0
  %v254 = vsel %vm251, %v250, 0
  %256 = vmatprep.subr.mxu0 0.0
  %257 = vmatpush1.xpose.msra.mxu0 %v254
  %258 = vmatprep.subr.mxu0 0.0
  %259 = vmatpush1.xpose.msra.mxu0 0.0
  %260 = vmatprep.subr.mxu0 0.0
  %261 = vmatpush1.xpose.msra.mxu0 0.0
  %262 = vmatprep.subr.mxu0 0.0
  %263 = vmatpush1.xpose.msra.mxu0 0.0
  %264 = vmatprep.subr.mxu0 0.0
  %265 = vmatpush1.xpose.msra.mxu0 0.0
  %266 = vmatprep.subr.mxu0 0.0
  %267 = vmatpush1.xpose.msra.mxu0 0.0
  %268 = vmatprep.subr.mxu0 0.0
  %269 = vmatpush1.xpose.msra.mxu0 0.0
  %270 = vmatprep.subr.mxu0 0.0
  %271 = vmatpush1.xpose.msra.mxu0 0.0
  %272 = vmatprep.subr.mxu0 0.0
  %273 = vmatpush1.xpose.msra.mxu0 0.0
  %274 = vmatprep.subr.mxu0 0.0
  %275 = vmatpush1.xpose.msra.mxu0 0.0
  %276 = vmatprep.subr.mxu0 0.0
  %277 = vmatpush1.xpose.msra.mxu0 0.0
  %278 = vmatprep.subr.mxu0 0.0
  %279 = vmatpush1.xpose.msra.mxu0 0.0
  %280 = vmatprep.subr.mxu0 0.0
  %281 = vmatpush1.xpose.msra.mxu0 0.0
  %282 = vmatprep.subr.mxu0 0.0
  %283 = vmatpush1.xpose.msra.mxu0 0.0
  %284 = vmatprep.subr.mxu0 0.0
  %285 = vmatpush1.xpose.msra.mxu0 0.0
  %286 = vmatprep.subr.mxu0 0.0
  %287 = vmatpush1.xpose.msra.mxu0 0.0
  %288 = vmatprep.subr.mxu0 0.0
  %289 = vmatpush1.xpose.msra.mxu0 0.0
  %290 = vmatprep.subr.mxu0 0.0
  %291 = vmatpush1.xpose.msra.mxu0 0.0
  %292 = vmatprep.subr.mxu0 0.0
  %293 = vmatpush1.xpose.msra.mxu0 0.0
  %294 = vmatprep.subr.mxu0 0.0
  %295 = vmatpush1.xpose.msra.mxu0 0.0
  %296 = vmatprep.subr.mxu0 0.0
  %297 = vmatpush1.xpose.msra.mxu0 0.0
  %298 = vmatprep.subr.mxu0 0.0
  %299 = vmatpush1.xpose.msra.mxu0 0.0
  %300 = vmatprep.subr.mxu0 0.0
  %301 = vmatpush1.xpose.msra.mxu0 0.0
  %302 = vmatprep.subr.mxu0 0.0
  %303 = vmatpush1.xpose.msra.mxu0 0.0
  %304 = vmatprep.subr.mxu0 0.0
  %305 = vmatpush1.xpose.msra.mxu0 0.0
  %306 = vmatprep.subr.mxu0 0.0
  %307 = vmatpush1.xpose.msra.mxu0 0.0
  %308 = vmatprep.subr.mxu0 0.0
  %309 = vmatpush1.xpose.msra.mxu0 0.0
  %310 = vmatprep.subr.mxu0 0.0
  %311 = vmatpush1.xpose.msra.mxu0 0.0
  %312 = vmatprep.subr.mxu0 0.0
  %313 = vmatpush1.xpose.msra.mxu0 0.0
  %314 = vmatprep.subr.mxu0 0.0
  %315 = vmatpush1.xpose.msra.mxu0 0.0
  %316 = vmatprep.subr.mxu0 0.0
  %317 = vmatpush1.xpose.msra.mxu0 0.0
  %318 = vmatprep.subr.mxu0 0.0
  %319 = vmatpush1.xpose.msra.mxu0 0.0
  %320 = vmatprep.mubr.f32.mxu0 0.0
  %321 = vmatmul.mubr.f32.gmra.mrb[0].mxu0 %v252
  %v322 = vpop.f32.mrb[0].mxu0
  %v323 = vadd.f32 0.0, %v322
  %v324 = vpop.f32.mrb[0].mxu0
  %325 = vdwg.mxu0
  %327 = vrot.lane.b32.xlu0 %v149, 96
  %v328 = vpop.permute.xlu0 %327
  %v329 = vsel %vm251, %v149, 0
  %v331 = vsel %vm251, %v328, 0
  %333 = vmatprep.subr.mxu0 0.0
  %334 = vmatpush1.xpose.msra.mxu0 %v331
  %335 = vmatprep.subr.mxu0 0.0
  %336 = vmatpush1.xpose.msra.mxu0 0.0
  %337 = vmatprep.subr.mxu0 0.0
  %338 = vmatpush1.xpose.msra.mxu0 0.0
  %339 = vmatprep.subr.mxu0 0.0
  %340 = vmatpush1.xpose.msra.mxu0 0.0
  %341 = vmatprep.subr.mxu0 0.0
  %342 = vmatpush1.xpose.msra.mxu0 0.0
  %343 = vmatprep.subr.mxu0 0.0
  %344 = vmatpush1.xpose.msra.mxu0 0.0
  %345 = vmatprep.subr.mxu0 0.0
  %346 = vmatpush1.xpose.msra.mxu0 0.0
  %347 = vmatprep.subr.mxu0 0.0
  %348 = vmatpush1.xpose.msra.mxu0 0.0
  %349 = vmatprep.subr.mxu0 0.0
  %350 = vmatpush1.xpose.msra.mxu0 0.0
  %351 = vmatprep.subr.mxu0 0.0
  %352 = vmatpush1.xpose.msra.mxu0 0.0
  %353 = vmatprep.subr.mxu0 0.0
  %354 = vmatpush1.xpose.msra.mxu0 0.0
  %355 = vmatprep.subr.mxu0 0.0
  %356 = vmatpush1.xpose.msra.mxu0 0.0
  %357 = vmatprep.subr.mxu0 0.0
  %358 = vmatpush1.xpose.msra.mxu0 0.0
  %359 = vmatprep.subr.mxu0 0.0
  %360 = vmatpush1.xpose.msra.mxu0 0.0
  %361 = vmatprep.subr.mxu0 0.0
  %362 = vmatpush1.xpose.msra.mxu0 0.0
  %363 = vmatprep.subr.mxu0 0.0
  %364 = vmatpush1.xpose.msra.mxu0 0.0
  %365 = vmatprep.subr.mxu0 0.0
  %366 = vmatpush1.xpose.msra.mxu0 0.0
  %367 = vmatprep.subr.mxu0 0.0
  %368 = vmatpush1.xpose.msra.mxu0 0.0
  %369 = vmatprep.subr.mxu0 0.0
  %370 = vmatpush1.xpose.msra.mxu0 0.0
  %371 = vmatprep.subr.mxu0 0.0
  %372 = vmatpush1.xpose.msra.mxu0 0.0
  %373 = vmatprep.subr.mxu0 0.0
  %374 = vmatpush1.xpose.msra.mxu0 0.0
  %375 = vmatprep.subr.mxu0 0.0
  %376 = vmatpush1.xpose.msra.mxu0 0.0
  %377 = vmatprep.subr.mxu0 0.0
  %378 = vmatpush1.xpose.msra.mxu0 0.0
  %379 = vmatprep.subr.mxu0 0.0
  %380 = vmatpush1.xpose.msra.mxu0 0.0
  %381 = vmatprep.subr.mxu0 0.0
  %382 = vmatpush1.xpose.msra.mxu0 0.0
  %383 = vmatprep.subr.mxu0 0.0
  %384 = vmatpush1.xpose.msra.mxu0 0.0
  %385 = vmatprep.subr.mxu0 0.0
  %386 = vmatpush1.xpose.msra.mxu0 0.0
  %387 = vmatprep.subr.mxu0 0.0
  %388 = vmatpush1.xpose.msra.mxu0 0.0
  %389 = vmatprep.subr.mxu0 0.0
  %390 = vmatpush1.xpose.msra.mxu0 0.0
  %391 = vmatprep.subr.mxu0 0.0
  %392 = vmatpush1.xpose.msra.mxu0 0.0
  %393 = vmatprep.subr.mxu0 0.0
  %394 = vmatpush1.xpose.msra.mxu0 0.0
  %395 = vmatprep.subr.mxu0 0.0
  %396 = vmatpush1.xpose.msra.mxu0 0.0
  %397 = vmatprep.mubr.f32.mxu0 0.0
  %398 = vmatmul.mubr.f32.gmra.mrb[0].mxu0 %v329
  %v399 = vpop.f32.mrb[0].mxu0
  %v400 = vadd.f32 0.0, %v399
  %v401 = vpop.f32.mrb[0].mxu0
  %402 = vdwg.mxu0
  %v403 = vsel %vm251, %v323, -inf
  %404 = vmax.xlane.f32.xlu0 %v403
  %v405 = vpop.xlane.xlu0 %404
  %v406 = vsel %vm251, %v400, -inf
  %407 = vmax.xlane.f32.xlu0 %v406
  %v408 = vpop.xlane.xlu0 %407
  %v409 = vsub.f32 %v323, %v405
  %v410 = vsub.f32 %v400, %v408
  %v411 = vmul.f32 %v409, 1.442695
  %v412 = vpow.pop %v411
  %v413 = vmul.f32 %v410, 1.442695
  %v414 = vpow.pop %v413
  %v415 = vsel %vm251, %v412, 0.0
  %416 = vadd.xlane.f32.xlu0 %v415
  %v417 = vpop.xlane.xlu0 %416
  %v418 = vsel %vm251, %v414, 0.0
  %419 = vadd.xlane.f32.xlu0 %v418
  %v420 = vpop.xlane.xlu0 %419
  %v421 = vrcp.pop %v417
  %v422 = vrcp.pop %v420
  %v423 = vmul.f32 %v412, %v421
  %v424 = vmul.f32 %v414, %v422
  %v426 = vsel %vm251, %v423, 0
  %428 = vmatprep.subr.mxu0 0.0
  %429 = vmatpush1.msra.mxu0 %v236
  %430 = vmatprep.subr.mxu0 0.0
  %431 = vmatpush1.msra.mxu0 0.0
  %432 = vmatprep.subr.mxu0 0.0
  %433 = vmatpush1.msra.mxu0 0.0
  %434 = vmatprep.subr.mxu0 0.0
  %435 = vmatpush1.msra.mxu0 0.0
  %436 = vmatprep.subr.mxu0 0.0
  %437 = vmatpush1.msra.mxu0 0.0
  %438 = vmatprep.subr.mxu0 0.0
  %439 = vmatpush1.msra.mxu0 0.0
  %440 = vmatprep.subr.mxu0 0.0
  %441 = vmatpush1.msra.mxu0 0.0
  %442 = vmatprep.subr.mxu0 0.0
  %443 = vmatpush1.msra.mxu0 0.0
  %444 = vmatprep.subr.mxu0 0.0
  %445 = vmatpush1.msra.mxu0 0.0
  %446 = vmatprep.subr.mxu0 0.0
  %447 = vmatpush1.msra.mxu0 0.0
  %448 = vmatprep.subr.mxu0 0.0
  %449 = vmatpush1.msra.mxu0 0.0
  %450 = vmatprep.subr.mxu0 0.0
  %451 = vmatpush1.msra.mxu0 0.0
  %452 = vmatprep.subr.mxu0 0.0
  %453 = vmatpush1.msra.mxu0 0.0
  %454 = vmatprep.subr.mxu0 0.0
  %455 = vmatpush1.msra.mxu0 0.0
  %456 = vmatprep.subr.mxu0 0.0
  %457 = vmatpush1.msra.mxu0 0.0
  %458 = vmatprep.subr.mxu0 0.0
  %459 = vmatpush1.msra.mxu0 0.0
  %460 = vmatprep.subr.mxu0 0.0
  %461 = vmatpush1.msra.mxu0 0.0
  %462 = vmatprep.subr.mxu0 0.0
  %463 = vmatpush1.msra.mxu0 0.0
  %464 = vmatprep.subr.mxu0 0.0
  %465 = vmatpush1.msra.mxu0 0.0
  %466 = vmatprep.subr.mxu0 0.0
  %467 = vmatpush1.msra.mxu0 0.0
  %468 = vmatprep.subr.mxu0 0.0
  %469 = vmatpush1.msra.mxu0 0.0
  %470 = vmatprep.subr.mxu0 0.0
  %471 = vmatpush1.msra.mxu0 0.0
  %472 = vmatprep.subr.mxu0 0.0
  %473 = vmatpush1.msra.mxu0 0.0
  %474 = vmatprep.subr.mxu0 0.0
  %475 = vmatpush1.msra.mxu0 0.0
  %476 = vmatprep.subr.mxu0 0.0
  %477 = vmatpush1.msra.mxu0 0.0
  %478 = vmatprep.subr.mxu0 0.0
  %479 = vmatpush1.msra.mxu0 0.0
  %480 = vmatprep.subr.mxu0 0.0
  %481 = vmatpush1.msra.mxu0 0.0
  %482 = vmatprep.subr.mxu0 0.0
  %483 = vmatpush1.msra.mxu0 0.0
  %484 = vmatprep.subr.mxu0 0.0
  %485 = vmatpush1.msra.mxu0 0.0
  %486 = vmatprep.subr.mxu0 0.0
  %487 = vmatpush1.msra.mxu0 0.0
  %488 = vmatprep.subr.mxu0 0.0
  %489 = vmatpush1.msra.mxu0 0.0
  %490 = vmatprep.subr.mxu0 0.0
  %491 = vmatpush1.msra.mxu0 0.0
  %492 = vmatprep.mubr.f32.mxu0 0.0
  %493 = vmatmul.mubr.f32.gmra.mrb[0].mxu0 %v426
  %v494 = vpop.f32.mrb[0].mxu0
  %v495 = vadd.f32 0.0, %v494
  %v496 = vpop.f32.mrb[0].mxu0
  %497 = vdwg.mxu0
  %v499 = vsel %vm251, %v424, 0
  %501 = vmatprep.subr.mxu0 0.0
  %502 = vmatpush1.msra.mxu0 %v241
  %503 = vmatprep.subr.mxu0 0.0
  %504 = vmatpush1.msra.mxu0 0.0
  %505 = vmatprep.subr.mxu0 0.0
  %506 = vmatpush1.msra.mxu0 0.0
  %507 = vmatprep.subr.mxu0 0.0
  %508 = vmatpush1.msra.mxu0 0.0
  %509 = vmatprep.subr.mxu0 0.0
  %510 = vmatpush1.msra.mxu0 0.0
  %511 = vmatprep.subr.mxu0 0.0
  %512 = vmatpush1.msra.mxu0 0.0
  %513 = vmatprep.subr.mxu0 0.0
  %514 = vmatpush1.msra.mxu0 0.0
  %515 = vmatprep.subr.mxu0 0.0
  %516 = vmatpush1.msra.mxu0 0.0
  %517 = vmatprep.subr.mxu0 0.0
  %518 = vmatpush1.msra.mxu0 0.0
  %519 = vmatprep.subr.mxu0 0.0
  %520 = vmatpush1.msra.mxu0 0.0
  %521 = vmatprep.subr.mxu0 0.0
  %522 = vmatpush1.msra.mxu0 0.0
  %523 = vmatprep.subr.mxu0 0.0
  %524 = vmatpush1.msra.mxu0 0.0
  %525 = vmatprep.subr.mxu0 0.0
  %526 = vmatpush1.msra.mxu0 0.0
  %527 = vmatprep.subr.mxu0 0.0
  %528 = vmatpush1.msra.mxu0 0.0
  %529 = vmatprep.subr.mxu0 0.0
  %530 = vmatpush1.msra.mxu0 0.0
  %531 = vmatprep.subr.mxu0 0.0
  %532 = vmatpush1.msra.mxu0 0.0
  %533 = vmatprep.subr.mxu0 0.0
  %534 = vmatpush1.msra.mxu0 0.0
  %535 = vmatprep.subr.mxu0 0.0
  %536 = vmatpush1.msra.mxu0 0.0
  %537 = vmatprep.subr.mxu0 0.0
  %538 = vmatpush1.msra.mxu0 0.0
  %539 = vmatprep.subr.mxu0 0.0
  %540 = vmatpush1.msra.mxu0 0.0
  %541 = vmatprep.subr.mxu0 0.0
  %542 = vmatpush1.msra.mxu0 0.0
  %543 = vmatprep.subr.mxu0 0.0
  %544 = vmatpush1.msra.mxu0 0.0
  %545 = vmatprep.subr.mxu0 0.0
  %546 = vmatpush1.msra.mxu0 0.0
  %547 = vmatprep.subr.mxu0 0.0
  %548 = vmatpush1.msra.mxu0 0.0
  %549 = vmatprep.subr.mxu0 0.0
  %550 = vmatpush1.msra.mxu0 0.0
  %551 = vmatprep.subr.mxu0 0.0
  %552 = vmatpush1.msra.mxu0 0.0
  %553 = vmatprep.subr.mxu0 0.0
  %554 = vmatpush1.msra.mxu0 0.0
  %555 = vmatprep.subr.mxu0 0.0
  %556 = vmatpush1.msra.mxu0 0.0
  %557 = vmatprep.subr.mxu0 0.0
  %558 = vmatpush1.msra.mxu0 0.0
  %559 = vmatprep.subr.mxu0 0.0
  %560 = vmatpush1.msra.mxu0 0.0
  %561 = vmatprep.subr.mxu0 0.0
  %562 = vmatpush1.msra.mxu0 0.0
  %563 = vmatprep.subr.mxu0 0.0
  %564 = vmatpush1.msra.mxu0 0.0
  %565 = vmatprep.mubr.f32.mxu0 0.0
  %566 = vmatmul.mubr.f32.gmra.mrb[0].mxu0 %v499
  %v567 = vpop.f32.mrb[0].mxu0
  %v568 = vadd.f32 0.0, %v567
  %v569 = vpop.f32.mrb[0].mxu0
  %570 = vdwg.mxu0
  %571 = vrot.lane.b32.xlu0 %v144, 120
  %v572 = vpop.permute.xlu0 %571
  %573 = vrot.lane.b32.xlu0 %v144, 88
  %v574 = vpop.permute.xlu0 %573
  %v575 = vsel %vm251, %v572, 0
  %v577 = vsel %vm251, %v574, 0
  %579 = vmatprep.subr.mxu0 0.0
  %580 = vmatpush1.xpose.msra.mxu0 %v577
  %581 = vmatprep.subr.mxu0 0.0
  %582 = vmatpush1.xpose.msra.mxu0 0.0
  %583 = vmatprep.subr.mxu0 0.0
  %584 = vmatpush1.xpose.msra.mxu0 0.0
  %585 = vmatprep.subr.mxu0 0.0
  %586 = vmatpush1.xpose.msra.mxu0 0.0
  %587 = vmatprep.subr.mxu0 0.0
  %588 = vmatpush1.xpose.msra.mxu0 0.0
  %589 = vmatprep.subr.mxu0 0.0
  %590 = vmatpush1.xpose.msra.mxu0 0.0
  %591 = vmatprep.subr.mxu0 0.0
  %592 = vmatpush1.xpose.msra.mxu0 0.0
  %593 = vmatprep.subr.mxu0 0.0
  %594 = vmatpush1.xpose.msra.mxu0 0.0
  %595 = vmatprep.subr.mxu0 0.0
  %596 = vmatpush1.xpose.msra.mxu0 0.0
  %597 = vmatprep.subr.mxu0 0.0
  %598 = vmatpush1.xpose.msra.mxu0 0.0
  %599 = vmatprep.subr.mxu0 0.0
  %600 = vmatpush1.xpose.msra.mxu0 0.0
  %601 = vmatprep.subr.mxu0 0.0
  %602 = vmatpush1.xpose.msra.mxu0 0.0
  %603 = vmatprep.subr.mxu0 0.0
  %604 = vmatpush1.xpose.msra.mxu0 0.0
  %605 = vmatprep.subr.mxu0 0.0
  %606 = vmatpush1.xpose.msra.mxu0 0.0
  %607 = vmatprep.subr.mxu0 0.0
  %608 = vmatpush1.xpose.msra.mxu0 0.0
  %609 = vmatprep.subr.mxu0 0.0
  %610 = vmatpush1.xpose.msra.mxu0 0.0
  %611 = vmatprep.subr.mxu0 0.0
  %612 = vmatpush1.xpose.msra.mxu0 0.0
  %613 = vmatprep.subr.mxu0 0.0
  %614 = vmatpush1.xpose.msra.mxu0 0.0
  %615 = vmatprep.subr.mxu0 0.0
  %616 = vmatpush1.xpose.msra.mxu0 0.0
  %617 = vmatprep.subr.mxu0 0.0
  %618 = vmatpush1.xpose.msra.mxu0 0.0
  %619 = vmatprep.subr.mxu0 0.0
  %620 = vmatpush1.xpose.msra.mxu0 0.0
  %621 = vmatprep.subr.mxu0 0.0
  %622 = vmatpush1.xpose.msra.mxu0 0.0
  %623 = vmatprep.subr.mxu0 0.0
  %624 = vmatpush1.xpose.msra.mxu0 0.0
  %625 = vmatprep.subr.mxu0 0.0
  %626 = vmatpush1.xpose.msra.mxu0 0.0
  %627 = vmatprep.subr.mxu0 0.0
  %628 = vmatpush1.xpose.msra.mxu0 0.0
  %629 = vmatprep.subr.mxu0 0.0
  %630 = vmatpush1.xpose.msra.mxu0 0.0
  %631 = vmatprep.subr.mxu0 0.0
  %632 = vmatpush1.xpose.msra.mxu0 0.0
  %633 = vmatprep.subr.mxu0 0.0
  %634 = vmatpush1.xpose.msra.mxu0 0.0
  %635 = vmatprep.subr.mxu0 0.0
  %636 = vmatpush1.xpose.msra.mxu0 0.0
  %637 = vmatprep.subr.mxu0 0.0
  %638 = vmatpush1.xpose.msra.mxu0 0.0
  %639 = vmatprep.subr.mxu0 0.0
  %640 = vmatpush1.xpose.msra.mxu0 0.0
  %641 = vmatprep.subr.mxu0 0.0
  %642 = vmatpush1.xpose.msra.mxu0 0.0
  %643 = vmatprep.mubr.f32.mxu0 0.0
  %644 = vmatmul.mubr.f32.gmra.mrb[0].mxu0 %v575
  %v645 = vpop.f32.mrb[0].mxu0
  %v646 = vadd.f32 0.0, %v645
  %v647 = vpop.f32.mrb[0].mxu0
  %648 = vdwg.mxu0
  %649 = vrot.lane.b32.xlu0 %v149, 120
  %v650 = vpop.permute.xlu0 %649
  %651 = vrot.lane.b32.xlu0 %v149, 88
  %v652 = vpop.permute.xlu0 %651
  %v653 = vsel %vm251, %v650, 0
  %v655 = vsel %vm251, %v652, 0
  %657 = vmatprep.subr.mxu0 0.0
  %658 = vmatpush1.xpose.msra.mxu0 %v655
  %659 = vmatprep.subr.mxu0 0.0
  %660 = vmatpush1.xpose.msra.mxu0 0.0
  %661 = vmatprep.subr.mxu0 0.0
  %662 = vmatpush1.xpose.msra.mxu0 0.0
  %663 = vmatprep.subr.mxu0 0.0
  %664 = vmatpush1.xpose.msra.mxu0 0.0
  %665 = vmatprep.subr.mxu0 0.0
  %666 = vmatpush1.xpose.msra.mxu0 0.0
  %667 = vmatprep.subr.mxu0 0.0
  %668 = vmatpush1.xpose.msra.mxu0 0.0
  %669 = vmatprep.subr.mxu0 0.0
  %670 = vmatpush1.xpose.msra.mxu0 0.0
  %671 = vmatprep.subr.mxu0 0.0
  %672 = vmatpush1.xpose.msra.mxu0 0.0
  %673 = vmatprep.subr.mxu0 0.0
  %674 = vmatpush1.xpose.msra.mxu0 0.0
  %675 = vmatprep.subr.mxu0 0.0
  %676 = vmatpush1.xpose.msra.mxu0 0.0
  %677 = vmatprep.subr.mxu0 0.0
  %678 = vmatpush1.xpose.msra.mxu0 0.0
  %679 = vmatprep.subr.mxu0 0.0
  %680 = vmatpush1.xpose.msra.mxu0 0.0
  %681 = vmatprep.subr.mxu0 0.0
  %682 = vmatpush1.xpose.msra.mxu0 0.0
  %683 = vmatprep.subr.mxu0 0.0
  %684 = vmatpush1.xpose.msra.mxu0 0.0
  %685 = vmatprep.subr.mxu0 0.0
  %686 = vmatpush1.xpose.msra.mxu0 0.0
  %687 = vmatprep.subr.mxu0 0.0
  %688 = vmatpush1.xpose.msra.mxu0 0.0
  %689 = vmatprep.subr.mxu0 0.0
  %690 = vmatpush1.xpose.msra.mxu0 0.0
  %691 = vmatprep.subr.mxu0 0.0
  %692 = vmatpush1.xpose.msra.mxu0 0.0
  %693 = vmatprep.subr.mxu0 0.0
  %694 = vmatpush1.xpose.msra.mxu0 0.0
  %695 = vmatprep.subr.mxu0 0.0
  %696 = vmatpush1.xpose.msra.mxu0 0.0
  %697 = vmatprep.subr.mxu0 0.0
  %698 = vmatpush1.xpose.msra.mxu0 0.0
  %699 = vmatprep.subr.mxu0 0.0
  %700 = vmatpush1.xpose.msra.mxu0 0.0
  %701 = vmatprep.subr.mxu0 0.0
  %702 = vmatpush1.xpose.msra.mxu0 0.0
  %703 = vmatprep.subr.mxu0 0.0
  %704 = vmatpush1.xpose.msra.mxu0 0.0
  %705 = vmatprep.subr.mxu0 0.0
  %706 = vmatpush1.xpose.msra.mxu0 0.0
  %707 = vmatprep.subr.mxu0 0.0
  %708 = vmatpush1.xpose.msra.mxu0 0.0
  %709 = vmatprep.subr.mxu0 0.0
  %710 = vmatpush1.xpose.msra.mxu0 0.0
  %711 = vmatprep.subr.mxu0 0.0
  %712 = vmatpush1.xpose.msra.mxu0 0.0
  %713 = vmatprep.subr.mxu0 0.0
  %714 = vmatpush1.xpose.msra.mxu0 0.0
  %715 = vmatprep.subr.mxu0 0.0
  %716 = vmatpush1.xpose.msra.mxu0 0.0
  %717 = vmatprep.subr.mxu0 0.0
  %718 = vmatpush1.xpose.msra.mxu0 0.0
  %719 = vmatprep.subr.mxu0 0.0
  %720 = vmatpush1.xpose.msra.mxu0 0.0
  %721 = vmatprep.mubr.f32.mxu0 0.0
  %722 = vmatmul.mubr.f32.gmra.mrb[0].mxu0 %v653
  %v723 = vpop.f32.mrb[0].mxu0
  %v724 = vadd.f32 0.0, %v723
  %v725 = vpop.f32.mrb[0].mxu0
  %726 = vdwg.mxu0
  %v727 = vsel %vm251, %v646, -inf
  %728 = vmax.xlane.f32.xlu0 %v727
  %v729 = vpop.xlane.xlu0 %728
  %v730 = vsel %vm251, %v724, -inf
  %731 = vmax.xlane.f32.xlu0 %v730
  %v732 = vpop.xlane.xlu0 %731
  %v733 = vsub.f32 %v646, %v729
  %v734 = vsub.f32 %v724, %v732
  %v735 = vmul.f32 %v733, 1.442695
  %v736 = vpow.pop %v735
  %v737 = vmul.f32 %v734, 1.442695
  %v738 = vpow.pop %v737
  %v739 = vsel %vm251, %v736, 0.0
  %740 = vadd.xlane.f32.xlu0 %v739
  %v741 = vpop.xlane.xlu0 %740
  %v742 = vsel %vm251, %v738, 0.0
  %743 = vadd.xlane.f32.xlu0 %v742
  %v744 = vpop.xlane.xlu0 %743
  %v745 = vrcp.pop %v741
  %v746 = vrcp.pop %v744
  %v747 = vmul.f32 %v736, %v745
  %v748 = vmul.f32 %v738, %v746
  %750 = vrot.lane.b32.xlu0 %v236, 120
  %v751 = vpop.permute.xlu0 %750
  %v754 = vsel %vm251, %v747, 0
  %756 = vmatprep.subr.mxu0 0.0
  %757 = vmatpush1.msra.mxu0 %v751
  %758 = vmatprep.subr.mxu0 0.0
  %759 = vmatpush1.msra.mxu0 0.0
  %760 = vmatprep.subr.mxu0 0.0
  %761 = vmatpush1.msra.mxu0 0.0
  %762 = vmatprep.subr.mxu0 0.0
  %763 = vmatpush1.msra.mxu0 0.0
  %764 = vmatprep.subr.mxu0 0.0
  %765 = vmatpush1.msra.mxu0 0.0
  %766 = vmatprep.subr.mxu0 0.0
  %767 = vmatpush1.msra.mxu0 0.0
  %768 = vmatprep.subr.mxu0 0.0
  %769 = vmatpush1.msra.mxu0 0.0
  %770 = vmatprep.subr.mxu0 0.0
  %771 = vmatpush1.msra.mxu0 0.0
  %772 = vmatprep.subr.mxu0 0.0
  %773 = vmatpush1.msra.mxu0 0.0
  %774 = vmatprep.subr.mxu0 0.0
  %775 = vmatpush1.msra.mxu0 0.0
  %776 = vmatprep.subr.mxu0 0.0
  %777 = vmatpush1.msra.mxu0 0.0
  %778 = vmatprep.subr.mxu0 0.0
  %779 = vmatpush1.msra.mxu0 0.0
  %780 = vmatprep.subr.mxu0 0.0
  %781 = vmatpush1.msra.mxu0 0.0
  %782 = vmatprep.subr.mxu0 0.0
  %783 = vmatpush1.msra.mxu0 0.0
  %784 = vmatprep.subr.mxu0 0.0
  %785 = vmatpush1.msra.mxu0 0.0
  %786 = vmatprep.subr.mxu0 0.0
  %787 = vmatpush1.msra.mxu0 0.0
  %788 = vmatprep.subr.mxu0 0.0
  %789 = vmatpush1.msra.mxu0 0.0
  %790 = vmatprep.subr.mxu0 0.0
  %791 = vmatpush1.msra.mxu0 0.0
  %792 = vmatprep.subr.mxu0 0.0
  %793 = vmatpush1.msra.mxu0 0.0
  %794 = vmatprep.subr.mxu0 0.0
  %795 = vmatpush1.msra.mxu0 0.0
  %796 = vmatprep.subr.mxu0 0.0
  %797 = vmatpush1.msra.mxu0 0.0
  %798 = vmatprep.subr.mxu0 0.0
  %799 = vmatpush1.msra.mxu0 0.0
  %800 = vmatprep.subr.mxu0 0.0
  %801 = vmatpush1.msra.mxu0 0.0
  %802 = vmatprep.subr.mxu0 0.0
  %803 = vmatpush1.msra.mxu0 0.0
  %804 = vmatprep.subr.mxu0 0.0
  %805 = vmatpush1.msra.mxu0 0.0
  %806 = vmatprep.subr.mxu0 0.0
  %807 = vmatpush1.msra.mxu0 0.0
  %808 = vmatprep.subr.mxu0 0.0
  %809 = vmatpush1.msra.mxu0 0.0
  %810 = vmatprep.subr.mxu0 0.0
  %811 = vmatpush1.msra.mxu0 0.0
  %812 = vmatprep.subr.mxu0 0.0
  %813 = vmatpush1.msra.mxu0 0.0
  %814 = vmatprep.subr.mxu0 0.0
  %815 = vmatpush1.msra.mxu0 0.0
  %816 = vmatprep.subr.mxu0 0.0
  %817 = vmatpush1.msra.mxu0 0.0
  %818 = vmatprep.subr.mxu0 0.0
  %819 = vmatpush1.msra.mxu0 0.0
  %820 = vmatprep.mubr.f32.mxu0 0.0
  %821 = vmatmul.mubr.f32.gmra.mrb[0].mxu0 %v754
  %v822 = vpop.f32.mrb[0].mxu0
  %v823 = vadd.f32 0.0, %v822
  %v824 = vpop.f32.mrb[0].mxu0
  %825 = vdwg.mxu0
  %827 = vrot.lane.b32.xlu0 %v241, 120
  %v828 = vpop.permute.xlu0 %827
  %v831 = vsel %vm251, %v748, 0
  %833 = vmatprep.subr.mxu0 0.0
  %834 = vmatpush1.msra.mxu0 %v828
  %835 = vmatprep.subr.mxu0 0.0
  %836 = vmatpush1.msra.mxu0 0.0
  %837 = vmatprep.subr.mxu0 0.0
  %838 = vmatpush1.msra.mxu0 0.0
  %839 = vmatprep.subr.mxu0 0.0
  %840 = vmatpush1.msra.mxu0 0.0
  %841 = vmatprep.subr.mxu0 0.0
  %842 = vmatpush1.msra.mxu0 0.0
  %843 = vmatprep.subr.mxu0 0.0
  %844 = vmatpush1.msra.mxu0 0.0
  %845 = vmatprep.subr.mxu0 0.0
  %846 = vmatpush1.msra.mxu0 0.0
  %847 = vmatprep.subr.mxu0 0.0
  %848 = vmatpush1.msra.mxu0 0.0
  %849 = vmatprep.subr.mxu0 0.0
  %850 = vmatpush1.msra.mxu0 0.0
  %851 = vmatprep.subr.mxu0 0.0
  %852 = vmatpush1.msra.mxu0 0.0
  %853 = vmatprep.subr.mxu0 0.0
  %854 = vmatpush1.msra.mxu0 0.0
  %855 = vmatprep.subr.mxu0 0.0
  %856 = vmatpush1.msra.mxu0 0.0
  %857 = vmatprep.subr.mxu0 0.0
  %858 = vmatpush1.msra.mxu0 0.0
  %859 = vmatprep.subr.mxu0 0.0
  %860 = vmatpush1.msra.mxu0 0.0
  %861 = vmatprep.subr.mxu0 0.0
  %862 = vmatpush1.msra.mxu0 0.0
  %863 = vmatprep.subr.mxu0 0.0
  %864 = vmatpush1.msra.mxu0 0.0
  %865 = vmatprep.subr.mxu0 0.0
  %866 = vmatpush1.msra.mxu0 0.0
  %867 = vmatprep.subr.mxu0 0.0
  %868 = vmatpush1.msra.mxu0 0.0
  %869 = vmatprep.subr.mxu0 0.0
  %870 = vmatpush1.msra.mxu0 0.0
  %871 = vmatprep.subr.mxu0 0.0
  %872 = vmatpush1.msra.mxu0 0.0
  %873 = vmatprep.subr.mxu0 0.0
  %874 = vmatpush1.msra.mxu0 0.0
  %875 = vmatprep.subr.mxu0 0.0
  %876 = vmatpush1.msra.mxu0 0.0
  %877 = vmatprep.subr.mxu0 0.0
  %878 = vmatpush1.msra.mxu0 0.0
  %879 = vmatprep.subr.mxu0 0.0
  %880 = vmatpush1.msra.mxu0 0.0
  %881 = vmatprep.subr.mxu0 0.0
  %882 = vmatpush1.msra.mxu0 0.0
  %883 = vmatprep.subr.mxu0 0.0
  %884 = vmatpush1.msra.mxu0 0.0
  %885 = vmatprep.subr.mxu0 0.0
  %886 = vmatpush1.msra.mxu0 0.0
  %887 = vmatprep.subr.mxu0 0.0
  %888 = vmatpush1.msra.mxu0 0.0
  %889 = vmatprep.subr.mxu0 0.0
  %890 = vmatpush1.msra.mxu0 0.0
  %891 = vmatprep.subr.mxu0 0.0
  %892 = vmatpush1.msra.mxu0 0.0
  %893 = vmatprep.subr.mxu0 0.0
  %894 = vmatpush1.msra.mxu0 0.0
  %895 = vmatprep.subr.mxu0 0.0
  %896 = vmatpush1.msra.mxu0 0.0
  %897 = vmatprep.mubr.f32.mxu0 0.0
  %898 = vmatmul.mubr.f32.gmra.mrb[0].mxu0 %v831
  %v899 = vpop.f32.mrb[0].mxu0
  %v900 = vadd.f32 0.0, %v899
  %v901 = vpop.f32.mrb[0].mxu0
  %902 = vdwg.mxu0
  %v904 = vsel %vm251, %v823, 0
  %v907 = vsel %vm251, %v900, 0
  %909 = vmatprep.subr.mxu0 0.0
  %910 = vmatpush1.msra.mxu0 %v245
  %911 = vmatprep.subr.mxu0 0.0
  %912 = vmatpush1.msra.mxu0 0.0
  %913 = vmatprep.subr.mxu0 0.0
  %914 = vmatpush1.msra.mxu0 0.0
  %915 = vmatprep.subr.mxu0 0.0
  %916 = vmatpush1.msra.mxu0 0.0
  %917 = vmatprep.subr.mxu0 0.0
  %918 = vmatpush1.msra.mxu0 0.0
  %919 = vmatprep.subr.mxu0 0.0
  %920 = vmatpush1.msra.mxu0 0.0
  %921 = vmatprep.subr.mxu0 0.0
  %922 = vmatpush1.msra.mxu0 0.0
  %923 = vmatprep.subr.mxu0 0.0
  %924 = vmatpush1.msra.mxu0 0.0
  %925 = vmatprep.subr.mxu0 0.0
  %926 = vmatpush1.msra.mxu0 0.0
  %927 = vmatprep.subr.mxu0 0.0
  %928 = vmatpush1.msra.mxu0 0.0
  %929 = vmatprep.subr.mxu0 0.0
  %930 = vmatpush1.msra.mxu0 0.0
  %931 = vmatprep.subr.mxu0 0.0
  %932 = vmatpush1.msra.mxu0 0.0
  %933 = vmatprep.subr.mxu0 0.0
  %934 = vmatpush1.msra.mxu0 0.0
  %935 = vmatprep.subr.mxu0 0.0
  %936 = vmatpush1.msra.mxu0 0.0
  %937 = vmatprep.subr.mxu0 0.0
  %938 = vmatpush1.msra.mxu0 0.0
  %939 = vmatprep.subr.mxu0 0.0
  %940 = vmatpush1.msra.mxu0 0.0
  %941 = vmatprep.subr.mxu0 0.0
  %942 = vmatpush1.msra.mxu0 0.0
  %943 = vmatprep.subr.mxu0 0.0
  %944 = vmatpush1.msra.mxu0 0.0
  %945 = vmatprep.subr.mxu0 0.0
  %946 = vmatpush1.msra.mxu0 0.0
  %947 = vmatprep.subr.mxu0 0.0
  %948 = vmatpush1.msra.mxu0 0.0
  %949 = vmatprep.subr.mxu0 0.0
  %950 = vmatpush1.msra.mxu0 0.0
  %951 = vmatprep.subr.mxu0 0.0
  %952 = vmatpush1.msra.mxu0 0.0
  %953 = vmatprep.subr.mxu0 0.0
  %954 = vmatpush1.msra.mxu0 0.0
  %955 = vmatprep.subr.mxu0 0.0
  %956 = vmatpush1.msra.mxu0 0.0
  %957 = vmatprep.subr.mxu0 0.0
  %958 = vmatpush1.msra.mxu0 0.0
  %959 = vmatprep.subr.mxu0 0.0
  %960 = vmatpush1.msra.mxu0 0.0
  %961 = vmatprep.subr.mxu0 0.0
  %962 = vmatpush1.msra.mxu0 0.0
  %963 = vmatprep.subr.mxu0 0.0
  %964 = vmatpush1.msra.mxu0 0.0
  %965 = vmatprep.subr.mxu0 0.0
  %966 = vmatpush1.msra.mxu0 0.0
  %967 = vmatprep.subr.mxu0 0.0
  %968 = vmatpush1.msra.mxu0 0.0
  %969 = vmatprep.subr.mxu0 0.0
  %970 = vmatpush1.msra.mxu0 0.0
  %971 = vmatprep.subr.mxu0 0.0
  %972 = vmatpush1.msra.mxu0 0.0
  %973 = vmatprep.mubr.f32.mxu0 0.0
  %974 = vmatmul.mubr.f32.gmra.mrb[0].mxu0 %v904
  %v975 = vpop.f32.mrb[0].mxu0
  %v976 = vadd.f32 0.0, %v975
  %v977 = vpop.f32.mrb[0].mxu0
  %978 = vmatprep.mubr.f32.mxu0 0.0
  %979 = vmatmul.mubr.f32.gmra.mrb[0].mxu0 %v907
  %v980 = vpop.f32.mrb[0].mxu0
  %v981 = vadd.f32 0.0, %v980
  %v982 = vpop.f32.mrb[0].mxu0
  %983 = vdwg.mxu0
  %v985 = vsel %vm251, %v495, 0
  %v988 = vsel %vm251, %v568, 0
  %990 = vmatprep.subr.mxu0 0.0
  %991 = vmatpush1.msra.mxu0 %v244
  %992 = vmatprep.subr.mxu0 0.0
  %993 = vmatpush1.msra.mxu0 0.0
  %994 = vmatprep.subr.mxu0 0.0
  %995 = vmatpush1.msra.mxu0 0.0
  %996 = vmatprep.subr.mxu0 0.0
  %997 = vmatpush1.msra.mxu0 0.0
  %998 = vmatprep.subr.mxu0 0.0
  %999 = vmatpush1.msra.mxu0 0.0
  %1000 = vmatprep.subr.mxu0 0.0
  %1001 = vmatpush1.msra.mxu0 0.0
  %1002 = vmatprep.subr.mxu0 0.0
  %1003 = vmatpush1.msra.mxu0 0.0
  %1004 = vmatprep.subr.mxu0 0.0
  %1005 = vmatpush1.msra.mxu0 0.0
  %1006 = vmatprep.subr.mxu0 0.0
  %1007 = vmatpush1.msra.mxu0 0.0
  %1008 = vmatprep.subr.mxu0 0.0
  %1009 = vmatpush1.msra.mxu0 0.0
  %1010 = vmatprep.subr.mxu0 0.0
  %1011 = vmatpush1.msra.mxu0 0.0
  %1012 = vmatprep.subr.mxu0 0.0
  %1013 = vmatpush1.msra.mxu0 0.0
  %1014 = vmatprep.subr.mxu0 0.0
  %1015 = vmatpush1.msra.mxu0 0.0
  %1016 = vmatprep.subr.mxu0 0.0
  %1017 = vmatpush1.msra.mxu0 0.0
  %1018 = vmatprep.subr.mxu0 0.0
  %1019 = vmatpush1.msra.mxu0 0.0
  %1020 = vmatprep.subr.mxu0 0.0
  %1021 = vmatpush1.msra.mxu0 0.0
  %1022 = vmatprep.subr.mxu0 0.0
  %1023 = vmatpush1.msra.mxu0 0.0
  %1024 = vmatprep.subr.mxu0 0.0
  %1025 = vmatpush1.msra.mxu0 0.0
  %1026 = vmatprep.subr.mxu0 0.0
  %1027 = vmatpush1.msra.mxu0 0.0
  %1028 = vmatprep.subr.mxu0 0.0
  %1029 = vmatpush1.msra.mxu0 0.0
  %1030 = vmatprep.subr.mxu0 0.0
  %1031 = vmatpush1.msra.mxu0 0.0
  %1032 = vmatprep.subr.mxu0 0.0
  %1033 = vmatpush1.msra.mxu0 0.0
  %1034 = vmatprep.subr.mxu0 0.0
  %1035 = vmatpush1.msra.mxu0 0.0
  %1036 = vmatprep.subr.mxu0 0.0
  %1037 = vmatpush1.msra.mxu0 0.0
  %1038 = vmatprep.subr.mxu0 0.0
  %1039 = vmatpush1.msra.mxu0 0.0
  %1040 = vmatprep.subr.mxu0 0.0
  %1041 = vmatpush1.msra.mxu0 0.0
  %1042 = vmatprep.subr.mxu0 0.0
  %1043 = vmatpush1.msra.mxu0 0.0
  %1044 = vmatprep.subr.mxu0 0.0
  %1045 = vmatpush1.msra.mxu0 0.0
  %1046 = vmatprep.subr.mxu0 0.0
  %1047 = vmatpush1.msra.mxu0 0.0
  %1048 = vmatprep.subr.mxu0 0.0
  %1049 = vmatpush1.msra.mxu0 0.0
  %1050 = vmatprep.subr.mxu0 0.0
  %1051 = vmatpush1.msra.mxu0 0.0
  %1052 = vmatprep.subr.mxu0 0.0
  %1053 = vmatpush1.msra.mxu0 0.0
  %1054 = vmatprep.mubr.f32.mxu0 0.0
  %1055 = vmatmul.mubr.f32.gmra.mrb[0].mxu0 %v985
  %v1056 = vpop.f32.mrb[0].mxu0
  %v1057 = vadd.f32 %v976, %v1056
  %v1058 = vpop.f32.mrb[0].mxu0
  %1059 = vmatprep.mubr.f32.mxu0 0.0
  %1060 = vmatmul.mubr.f32.gmra.mrb[0].mxu0 %v988
  %v1061 = vpop.f32.mrb[0].mxu0
  %v1062 = vadd.f32 %v981, %v1061
  %v1063 = vpop.f32.mrb[0].mxu0
  %1064 = vdwg.mxu0
  %1065 = vrot.lane.b32.xlu0 %v144, 112
  %v1066 = vpop.permute.xlu0 %1065
  %1067 = vrot.lane.b32.xlu0 %v144, 80
  %v1068 = vpop.permute.xlu0 %1067
  %v1069 = vsel %vm251, %v1066, 0
  %v1071 = vsel %vm251, %v1068, 0
  %1073 = vmatprep.subr.mxu0 0.0
  %1074 = vmatpush1.xpose.msra.mxu0 %v1071
  %1075 = vmatprep.subr.mxu0 0.0
  %1076 = vmatpush1.xpose.msra.mxu0 0.0
  %1077 = vmatprep.subr.mxu0 0.0
  %1078 = vmatpush1.xpose.msra.mxu0 0.0
  %1079 = vmatprep.subr.mxu0 0.0
  %1080 = vmatpush1.xpose.msra.mxu0 0.0
  %1081 = vmatprep.subr.mxu0 0.0
  %1082 = vmatpush1.xpose.msra.mxu0 0.0
  %1083 = vmatprep.subr.mxu0 0.0
  %1084 = vmatpush1.xpose.msra.mxu0 0.0
  %1085 = vmatprep.subr.mxu0 0.0
  %1086 = vmatpush1.xpose.msra.mxu0 0.0
  %1087 = vmatprep.subr.mxu0 0.0
  %1088 = vmatpush1.xpose.msra.mxu0 0.0
  %1089 = vmatprep.subr.mxu0 0.0
  %1090 = vmatpush1.xpose.msra.mxu0 0.0
  %1091 = vmatprep.subr.mxu0 0.0
  %1092 = vmatpush1.xpose.msra.mxu0 0.0
  %1093 = vmatprep.subr.mxu0 0.0
  %1094 = vmatpush1.xpose.msra.mxu0 0.0
  %1095 = vmatprep.subr.mxu0 0.0
  %1096 = vmatpush1.xpose.msra.mxu0 0.0
  %1097 = vmatprep.subr.mxu0 0.0
  %1098 = vmatpush1.xpose.msra.mxu0 0.0
  %1099 = vmatprep.subr.mxu0 0.0
  %1100 = vmatpush1.xpose.msra.mxu0 0.0
  %1101 = vmatprep.subr.mxu0 0.0
  %1102 = vmatpush1.xpose.msra.mxu0 0.0
  %1103 = vmatprep.subr.mxu0 0.0
  %1104 = vmatpush1.xpose.msra.mxu0 0.0
  %1105 = vmatprep.subr.mxu0 0.0
  %1106 = vmatpush1.xpose.msra.mxu0 0.0
  %1107 = vmatprep.subr.mxu0 0.0
  %1108 = vmatpush1.xpose.msra.mxu0 0.0
  %1109 = vmatprep.subr.mxu0 0.0
  %1110 = vmatpush1.xpose.msra.mxu0 0.0
  %1111 = vmatprep.subr.mxu0 0.0
  %1112 = vmatpush1.xpose.msra.mxu0 0.0
  %1113 = vmatprep.subr.mxu0 0.0
  %1114 = vmatpush1.xpose.msra.mxu0 0.0
  %1115 = vmatprep.subr.mxu0 0.0
  %1116 = vmatpush1.xpose.msra.mxu0 0.0
  %1117 = vmatprep.subr.mxu0 0.0
  %1118 = vmatpush1.xpose.msra.mxu0 0.0
  %1119 = vmatprep.subr.mxu0 0.0
  %1120 = vmatpush1.xpose.msra.mxu0 0.0
  %1121 = vmatprep.subr.mxu0 0.0
  %1122 = vmatpush1.xpose.msra.mxu0 0.0
  %1123 = vmatprep.subr.mxu0 0.0
  %1124 = vmatpush1.xpose.msra.mxu0 0.0
  %1125 = vmatprep.subr.mxu0 0.0
  %1126 = vmatpush1.xpose.msra.mxu0 0.0
  %1127 = vmatprep.subr.mxu0 0.0
  %1128 = vmatpush1.xpose.msra.mxu0 0.0
  %1129 = vmatprep.subr.mxu0 0.0
  %1130 = vmatpush1.xpose.msra.mxu0 0.0
  %1131 = vmatprep.subr.mxu0 0.0
  %1132 = vmatpush1.xpose.msra.mxu0 0.0
  %1133 = vmatprep.subr.mxu0 0.0
  %1134 = vmatpush1.xpose.msra.mxu0 0.0
  %1135 = vmatprep.subr.mxu0 0.0
  %1136 = vmatpush1.xpose.msra.mxu0 0.0
  %1137 = vmatprep.mubr.f32.mxu0 0.0
  %1138 = vmatmul.mubr.f32.gmra.mrb[0].mxu0 %v1069
  %v1139 = vpop.f32.mrb[0].mxu0
  %v1140 = vadd.f32 0.0, %v1139
  %v1141 = vpop.f32.mrb[0].mxu0
  %1142 = vdwg.mxu0
  %1143 = vrot.lane.b32.xlu0 %v149, 112
  %v1144 = vpop.permute.xlu0 %1143
  %1145 = vrot.lane.b32.xlu0 %v149, 80
  %v1146 = vpop.permute.xlu0 %1145
  %v1147 = vsel %vm251, %v1144, 0
  %v1149 = vsel %vm251, %v1146, 0
  %1151 = vmatprep.subr.mxu0 0.0
  %1152 = vmatpush1.xpose.msra.mxu0 %v1149
  %1153 = vmatprep.subr.mxu0 0.0
  %1154 = vmatpush1.xpose.msra.mxu0 0.0
  %1155 = vmatprep.subr.mxu0 0.0
  %1156 = vmatpush1.xpose.msra.mxu0 0.0
  %1157 = vmatprep.subr.mxu0 0.0
  %1158 = vmatpush1.xpose.msra.mxu0 0.0
  %1159 = vmatprep.subr.mxu0 0.0
  %1160 = vmatpush1.xpose.msra.mxu0 0.0
  %1161 = vmatprep.subr.mxu0 0.0
  %1162 = vmatpush1.xpose.msra.mxu0 0.0
  %1163 = vmatprep.subr.mxu0 0.0
  %1164 = vmatpush1.xpose.msra.mxu0 0.0
  %1165 = vmatprep.subr.mxu0 0.0
  %1166 = vmatpush1.xpose.msra.mxu0 0.0
  %1167 = vmatprep.subr.mxu0 0.0
  %1168 = vmatpush1.xpose.msra.mxu0 0.0
  %1169 = vmatprep.subr.mxu0 0.0
  %1170 = vmatpush1.xpose.msra.mxu0 0.0
  %1171 = vmatprep.subr.mxu0 0.0
  %1172 = vmatpush1.xpose.msra.mxu0 0.0
  %1173 = vmatprep.subr.mxu0 0.0
  %1174 = vmatpush1.xpose.msra.mxu0 0.0
  %1175 = vmatprep.subr.mxu0 0.0
  %1176 = vmatpush1.xpose.msra.mxu0 0.0
  %1177 = vmatprep.subr.mxu0 0.0
  %1178 = vmatpush1.xpose.msra.mxu0 0.0
  %1179 = vmatprep.subr.mxu0 0.0
  %1180 = vmatpush1.xpose.msra.mxu0 0.0
  %1181 = vmatprep.subr.mxu0 0.0
  %1182 = vmatpush1.xpose.msra.mxu0 0.0
  %1183 = vmatprep.subr.mxu0 0.0
  %1184 = vmatpush1.xpose.msra.mxu0 0.0
  %1185 = vmatprep.subr.mxu0 0.0
  %1186 = vmatpush1.xpose.msra.mxu0 0.0
  %1187 = vmatprep.subr.mxu0 0.0
  %1188 = vmatpush1.xpose.msra.mxu0 0.0
  %1189 = vmatprep.subr.mxu0 0.0
  %1190 = vmatpush1.xpose.msra.mxu0 0.0
  %1191 = vmatprep.subr.mxu0 0.0
  %1192 = vmatpush1.xpose.msra.mxu0 0.0
  %1193 = vmatprep.subr.mxu0 0.0
  %1194 = vmatpush1.xpose.msra.mxu0 0.0
  %1195 = vmatprep.subr.mxu0 0.0
  %1196 = vmatpush1.xpose.msra.mxu0 0.0
  %1197 = vmatprep.subr.mxu0 0.0
  %1198 = vmatpush1.xpose.msra.mxu0 0.0
  %1199 = vmatprep.subr.mxu0 0.0
  %1200 = vmatpush1.xpose.msra.mxu0 0.0
  %1201 = vmatprep.subr.mxu0 0.0
  %1202 = vmatpush1.xpose.msra.mxu0 0.0
  %1203 = vmatprep.subr.mxu0 0.0
  %1204 = vmatpush1.xpose.msra.mxu0 0.0
  %1205 = vmatprep.subr.mxu0 0.0
  %1206 = vmatpush1.xpose.msra.mxu0 0.0
  %1207 = vmatprep.subr.mxu0 0.0
  %1208 = vmatpush1.xpose.msra.mxu0 0.0
  %1209 = vmatprep.subr.mxu0 0.0
  %1210 = vmatpush1.xpose.msra.mxu0 0.0
  %1211 = vmatprep.subr.mxu0 0.0
  %1212 = vmatpush1.xpose.msra.mxu0 0.0
  %1213 = vmatprep.subr.mxu0 0.0
  %1214 = vmatpush1.xpose.msra.mxu0 0.0
  %1215 = vmatprep.mubr.f32.mxu0 0.0
  %1216 = vmatmul.mubr.f32.gmra.mrb[0].mxu0 %v1147
  %v1217 = vpop.f32.mrb[0].mxu0
  %v1218 = vadd.f32 0.0, %v1217
  %v1219 = vpop.f32.mrb[0].mxu0
  %1220 = vdwg.mxu0
  %v1221 = vsel %vm251, %v1140, -inf
  %1222 = vmax.xlane.f32.xlu0 %v1221
  %v1223 = vpop.xlane.xlu0 %1222
  %v1224 = vsel %vm251, %v1218, -inf
  %1225 = vmax.xlane.f32.xlu0 %v1224
  %v1226 = vpop.xlane.xlu0 %1225
  %v1227 = vsub.f32 %v1140, %v1223
  %v1228 = vsub.f32 %v1218, %v1226
  %v1229 = vmul.f32 %v1227, 1.442695
  %v1230 = vpow.pop %v1229
  %v1231 = vmul.f32 %v1228, 1.442695
  %v1232 = vpow.pop %v1231
  %v1233 = vsel %vm251, %v1230, 0.0
  %1234 = vadd.xlane.f32.xlu0 %v1233
  %v1235 = vpop.xlane.xlu0 %1234
  %v1236 = vsel %vm251, %v1232, 0.0
  %1237 = vadd.xlane.f32.xlu0 %v1236
  %v1238 = vpop.xlane.xlu0 %1237
  %v1239 = vrcp.pop %v1235
  %v1240 = vrcp.pop %v1238
  %v1241 = vmul.f32 %v1230, %v1239
  %v1242 = vmul.f32 %v1232, %v1240
  %1243 = vrot.lane.b32.xlu0 %v236, 112
  %v1244 = vpop.permute.xlu0 %1243
  %v1247 = vsel %vm251, %v1241, 0
  %1249 = vmatprep.subr.mxu0 0.0
  %1250 = vmatpush1.msra.mxu0 %v1244
  %1251 = vmatprep.subr.mxu0 0.0
  %1252 = vmatpush1.msra.mxu0 0.0
  %1253 = vmatprep.subr.mxu0 0.0
  %1254 = vmatpush1.msra.mxu0 0.0
  %1255 = vmatprep.subr.mxu0 0.0
  %1256 = vmatpush1.msra.mxu0 0.0
  %1257 = vmatprep.subr.mxu0 0.0
  %1258 = vmatpush1.msra.mxu0 0.0
  %1259 = vmatprep.subr.mxu0 0.0
  %1260 = vmatpush1.msra.mxu0 0.0
  %1261 = vmatprep.subr.mxu0 0.0
  %1262 = vmatpush1.msra.mxu0 0.0
  %1263 = vmatprep.subr.mxu0 0.0
  %1264 = vmatpush1.msra.mxu0 0.0
  %1265 = vmatprep.subr.mxu0 0.0
  %1266 = vmatpush1.msra.mxu0 0.0
  %1267 = vmatprep.subr.mxu0 0.0
  %1268 = vmatpush1.msra.mxu0 0.0
  %1269 = vmatprep.subr.mxu0 0.0
  %1270 = vmatpush1.msra.mxu0 0.0
  %1271 = vmatprep.subr.mxu0 0.0
  %1272 = vmatpush1.msra.mxu0 0.0
  %1273 = vmatprep.subr.mxu0 0.0
  %1274 = vmatpush1.msra.mxu0 0.0
  %1275 = vmatprep.subr.mxu0 0.0
  %1276 = vmatpush1.msra.mxu0 0.0
  %1277 = vmatprep.subr.mxu0 0.0
  %1278 = vmatpush1.msra.mxu0 0.0
  %1279 = vmatprep.subr.mxu0 0.0
  %1280 = vmatpush1.msra.mxu0 0.0
  %1281 = vmatprep.subr.mxu0 0.0
  %1282 = vmatpush1.msra.mxu0 0.0
  %1283 = vmatprep.subr.mxu0 0.0
  %1284 = vmatpush1.msra.mxu0 0.0
  %1285 = vmatprep.subr.mxu0 0.0
  %1286 = vmatpush1.msra.mxu0 0.0
  %1287 = vmatprep.subr.mxu0 0.0
  %1288 = vmatpush1.msra.mxu0 0.0
  %1289 = vmatprep.subr.mxu0 0.0
  %1290 = vmatpush1.msra.mxu0 0.0
  %1291 = vmatprep.subr.mxu0 0.0
  %1292 = vmatpush1.msra.mxu0 0.0
  %1293 = vmatprep.subr.mxu0 0.0
  %1294 = vmatpush1.msra.mxu0 0.0
  %1295 = vmatprep.subr.mxu0 0.0
  %1296 = vmatpush1.msra.mxu0 0.0
  %1297 = vmatprep.subr.mxu0 0.0
  %1298 = vmatpush1.msra.mxu0 0.0
  %1299 = vmatprep.subr.mxu0 0.0
  %1300 = vmatpush1.msra.mxu0 0.0
  %1301 = vmatprep.subr.mxu0 0.0
  %1302 = vmatpush1.msra.mxu0 0.0
  %1303 = vmatprep.subr.mxu0 0.0
  %1304 = vmatpush1.msra.mxu0 0.0
  %1305 = vmatprep.subr.mxu0 0.0
  %1306 = vmatpush1.msra.mxu0 0.0
  %1307 = vmatprep.subr.mxu0 0.0
  %1308 = vmatpush1.msra.mxu0 0.0
  %1309 = vmatprep.subr.mxu0 0.0
  %1310 = vmatpush1.msra.mxu0 0.0
  %1311 = vmatprep.subr.mxu0 0.0
  %1312 = vmatpush1.msra.mxu0 0.0
  %1313 = vmatprep.mubr.f32.mxu0 0.0
  %1314 = vmatmul.mubr.f32.gmra.mrb[0].mxu0 %v1247
  %v1315 = vpop.f32.mrb[0].mxu0
  %v1316 = vadd.f32 0.0, %v1315
  %v1317 = vpop.f32.mrb[0].mxu0
  %1318 = vdwg.mxu0
  %1319 = vrot.lane.b32.xlu0 %v241, 112
  %v1320 = vpop.permute.xlu0 %1319
  %v1323 = vsel %vm251, %v1242, 0
  %1325 = vmatprep.subr.mxu0 0.0
  %1326 = vmatpush1.msra.mxu0 %v1320
  %1327 = vmatprep.subr.mxu0 0.0
  %1328 = vmatpush1.msra.mxu0 0.0
  %1329 = vmatprep.subr.mxu0 0.0
  %1330 = vmatpush1.msra.mxu0 0.0
  %1331 = vmatprep.subr.mxu0 0.0
  %1332 = vmatpush1.msra.mxu0 0.0
  %1333 = vmatprep.subr.mxu0 0.0
  %1334 = vmatpush1.msra.mxu0 0.0
  %1335 = vmatprep.subr.mxu0 0.0
  %1336 = vmatpush1.msra.mxu0 0.0
  %1337 = vmatprep.subr.mxu0 0.0
  %1338 = vmatpush1.msra.mxu0 0.0
  %1339 = vmatprep.subr.mxu0 0.0
  %1340 = vmatpush1.msra.mxu0 0.0
  %1341 = vmatprep.subr.mxu0 0.0
  %1342 = vmatpush1.msra.mxu0 0.0
  %1343 = vmatprep.subr.mxu0 0.0
  %1344 = vmatpush1.msra.mxu0 0.0
  %1345 = vmatprep.subr.mxu0 0.0
  %1346 = vmatpush1.msra.mxu0 0.0
  %1347 = vmatprep.subr.mxu0 0.0
  %1348 = vmatpush1.msra.mxu0 0.0
  %1349 = vmatprep.subr.mxu0 0.0
  %1350 = vmatpush1.msra.mxu0 0.0
  %1351 = vmatprep.subr.mxu0 0.0
  %1352 = vmatpush1.msra.mxu0 0.0
  %1353 = vmatprep.subr.mxu0 0.0
  %1354 = vmatpush1.msra.mxu0 0.0
  %1355 = vmatprep.subr.mxu0 0.0
  %1356 = vmatpush1.msra.mxu0 0.0
  %1357 = vmatprep.subr.mxu0 0.0
  %1358 = vmatpush1.msra.mxu0 0.0
  %1359 = vmatprep.subr.mxu0 0.0
  %1360 = vmatpush1.msra.mxu0 0.0
  %1361 = vmatprep.subr.mxu0 0.0
  %1362 = vmatpush1.msra.mxu0 0.0
  %1363 = vmatprep.subr.mxu0 0.0
  %1364 = vmatpush1.msra.mxu0 0.0
  %1365 = vmatprep.subr.mxu0 0.0
  %1366 = vmatpush1.msra.mxu0 0.0
  %1367 = vmatprep.subr.mxu0 0.0
  %1368 = vmatpush1.msra.mxu0 0.0
  %1369 = vmatprep.subr.mxu0 0.0
  %1370 = vmatpush1.msra.mxu0 0.0
  %1371 = vmatprep.subr.mxu0 0.0
  %1372 = vmatpush1.msra.mxu0 0.0
  %1373 = vmatprep.subr.mxu0 0.0
  %1374 = vmatpush1.msra.mxu0 0.0
  %1375 = vmatprep.subr.mxu0 0.0
  %1376 = vmatpush1.msra.mxu0 0.0
  %1377 = vmatprep.subr.mxu0 0.0
  %1378 = vmatpush1.msra.mxu0 0.0
  %1379 = vmatprep.subr.mxu0 0.0
  %1380 = vmatpush1.msra.mxu0 0.0
  %1381 = vmatprep.subr.mxu0 0.0
  %1382 = vmatpush1.msra.mxu0 0.0
  %1383 = vmatprep.subr.mxu0 0.0
  %1384 = vmatpush1.msra.mxu0 0.0
  %1385 = vmatprep.subr.mxu0 0.0
  %1386 = vmatpush1.msra.mxu0 0.0
  %1387 = vmatprep.subr.mxu0 0.0
  %1388 = vmatpush1.msra.mxu0 0.0
  %1389 = vmatprep.mubr.f32.mxu0 0.0
  %1390 = vmatmul.mubr.f32.gmra.mrb[0].mxu0 %v1323
  %v1391 = vpop.f32.mrb[0].mxu0
  %v1392 = vadd.f32 0.0, %v1391
  %v1393 = vpop.f32.mrb[0].mxu0
  %1394 = vdwg.mxu0
  %v1396 = vsel %vm251, %v1316, 0
  %v1399 = vsel %vm251, %v1392, 0
  %1401 = vmatprep.subr.mxu0 0.0
  %1402 = vmatpush1.msra.mxu0 %v246
  %1403 = vmatprep.subr.mxu0 0.0
  %1404 = vmatpush1.msra.mxu0 0.0
  %1405 = vmatprep.subr.mxu0 0.0
  %1406 = vmatpush1.msra.mxu0 0.0
  %1407 = vmatprep.subr.mxu0 0.0
  %1408 = vmatpush1.msra.mxu0 0.0
  %1409 = vmatprep.subr.mxu0 0.0
  %1410 = vmatpush1.msra.mxu0 0.0
  %1411 = vmatprep.subr.mxu0 0.0
  %1412 = vmatpush1.msra.mxu0 0.0
  %1413 = vmatprep.subr.mxu0 0.0
  %1414 = vmatpush1.msra.mxu0 0.0
  %1415 = vmatprep.subr.mxu0 0.0
  %1416 = vmatpush1.msra.mxu0 0.0
  %1417 = vmatprep.subr.mxu0 0.0
  %1418 = vmatpush1.msra.mxu0 0.0
  %1419 = vmatprep.subr.mxu0 0.0
  %1420 = vmatpush1.msra.mxu0 0.0
  %1421 = vmatprep.subr.mxu0 0.0
  %1422 = vmatpush1.msra.mxu0 0.0
  %1423 = vmatprep.subr.mxu0 0.0
  %1424 = vmatpush1.msra.mxu0 0.0
  %1425 = vmatprep.subr.mxu0 0.0
  %1426 = vmatpush1.msra.mxu0 0.0
  %1427 = vmatprep.subr.mxu0 0.0
  %1428 = vmatpush1.msra.mxu0 0.0
  %1429 = vmatprep.subr.mxu0 0.0
  %1430 = vmatpush1.msra.mxu0 0.0
  %1431 = vmatprep.subr.mxu0 0.0
  %1432 = vmatpush1.msra.mxu0 0.0
  %1433 = vmatprep.subr.mxu0 0.0
  %1434 = vmatpush1.msra.mxu0 0.0
  %1435 = vmatprep.subr.mxu0 0.0
  %1436 = vmatpush1.msra.mxu0 0.0
  %1437 = vmatprep.subr.mxu0 0.0
  %1438 = vmatpush1.msra.mxu0 0.0
  %1439 = vmatprep.subr.mxu0 0.0
  %1440 = vmatpush1.msra.mxu0 0.0
  %1441 = vmatprep.subr.mxu0 0.0
  %1442 = vmatpush1.msra.mxu0 0.0
  %1443 = vmatprep.subr.mxu0 0.0
  %1444 = vmatpush1.msra.mxu0 0.0
  %1445 = vmatprep.subr.mxu0 0.0
  %1446 = vmatpush1.msra.mxu0 0.0
  %1447 = vmatprep.subr.mxu0 0.0
  %1448 = vmatpush1.msra.mxu0 0.0
  %1449 = vmatprep.subr.mxu0 0.0
  %1450 = vmatpush1.msra.mxu0 0.0
  %1451 = vmatprep.subr.mxu0 0.0
  %1452 = vmatpush1.msra.mxu0 0.0
  %1453 = vmatprep.subr.mxu0 0.0
  %1454 = vmatpush1.msra.mxu0 0.0
  %1455 = vmatprep.subr.mxu0 0.0
  %1456 = vmatpush1.msra.mxu0 0.0
  %1457 = vmatprep.subr.mxu0 0.0
  %1458 = vmatpush1.msra.mxu0 0.0
  %1459 = vmatprep.subr.mxu0 0.0
  %1460 = vmatpush1.msra.mxu0 0.0
  %1461 = vmatprep.subr.mxu0 0.0
  %1462 = vmatpush1.msra.mxu0 0.0
  %1463 = vmatprep.subr.mxu0 0.0
  %1464 = vmatpush1.msra.mxu0 0.0
  %1465 = vmatprep.mubr.f32.mxu0 0.0
  %1466 = vmatmul.mubr.f32.gmra.mrb[0].mxu0 %v1396
  %v1467 = vpop.f32.mrb[0].mxu0
  %v1468 = vadd.f32 0.0, %v1467
  %v1469 = vpop.f32.mrb[0].mxu0
  %1470 = vmatprep.mubr.f32.mxu0 0.0
  %1471 = vmatmul.mubr.f32.gmra.mrb[0].mxu0 %v1399
  %v1472 = vpop.f32.mrb[0].mxu0
  %v1473 = vadd.f32 0.0, %v1472
  %v1474 = vpop.f32.mrb[0].mxu0
  %1475 = vdwg.mxu0
  %v1476 = vadd.f32 %v1057, %v1468
  %v1477 = vadd.f32 %v1062, %v1473
  %1478 = vrot.lane.b32.xlu0 %v144, 104
  %v1479 = vpop.permute.xlu0 %1478
  %1480 = vrot.lane.b32.xlu0 %v144, 72
  %v1481 = vpop.permute.xlu0 %1480
  %v1482 = vsel %vm251, %v1479, 0
  %v1484 = vsel %vm251, %v1481, 0
  %1486 = vmatprep.subr.mxu0 0.0
  %1487 = vmatpush1.xpose.msra.mxu0 %v1484
  %1488 = vmatprep.subr.mxu0 0.0
  %1489 = vmatpush1.xpose.msra.mxu0 0.0
  %1490 = vmatprep.subr.mxu0 0.0
  %1491 = vmatpush1.xpose.msra.mxu0 0.0
  %1492 = vmatprep.subr.mxu0 0.0
  %1493 = vmatpush1.xpose.msra.mxu0 0.0
  %1494 = vmatprep.subr.mxu0 0.0
  %1495 = vmatpush1.xpose.msra.mxu0 0.0
  %1496 = vmatprep.subr.mxu0 0.0
  %1497 = vmatpush1.xpose.msra.mxu0 0.0
  %1498 = vmatprep.subr.mxu0 0.0
  %1499 = vmatpush1.xpose.msra.mxu0 0.0
  %1500 = vmatprep.subr.mxu0 0.0
  %1501 = vmatpush1.xpose.msra.mxu0 0.0
  %1502 = vmatprep.subr.mxu0 0.0
  %1503 = vmatpush1.xpose.msra.mxu0 0.0
  %1504 = vmatprep.subr.mxu0 0.0
  %1505 = vmatpush1.xpose.msra.mxu0 0.0
  %1506 = vmatprep.subr.mxu0 0.0
  %1507 = vmatpush1.xpose.msra.mxu0 0.0
  %1508 = vmatprep.subr.mxu0 0.0
  %1509 = vmatpush1.xpose.msra.mxu0 0.0
  %1510 = vmatprep.subr.mxu0 0.0
  %1511 = vmatpush1.xpose.msra.mxu0 0.0
  %1512 = vmatprep.subr.mxu0 0.0
  %1513 = vmatpush1.xpose.msra.mxu0 0.0
  %1514 = vmatprep.subr.mxu0 0.0
  %1515 = vmatpush1.xpose.msra.mxu0 0.0
  %1516 = vmatprep.subr.mxu0 0.0
  %1517 = vmatpush1.xpose.msra.mxu0 0.0
  %1518 = vmatprep.subr.mxu0 0.0
  %1519 = vmatpush1.xpose.msra.mxu0 0.0
  %1520 = vmatprep.subr.mxu0 0.0
  %1521 = vmatpush1.xpose.msra.mxu0 0.0
  %1522 = vmatprep.subr.mxu0 0.0
  %1523 = vmatpush1.xpose.msra.mxu0 0.0
  %1524 = vmatprep.subr.mxu0 0.0
  %1525 = vmatpush1.xpose.msra.mxu0 0.0
  %1526 = vmatprep.subr.mxu0 0.0
  %1527 = vmatpush1.xpose.msra.mxu0 0.0
  %1528 = vmatprep.subr.mxu0 0.0
  %1529 = vmatpush1.xpose.msra.mxu0 0.0
  %1530 = vmatprep.subr.mxu0 0.0
  %1531 = vmatpush1.xpose.msra.mxu0 0.0
  %1532 = vmatprep.subr.mxu0 0.0
  %1533 = vmatpush1.xpose.msra.mxu0 0.0
  %1534 = vmatprep.subr.mxu0 0.0
  %1535 = vmatpush1.xpose.msra.mxu0 0.0
  %1536 = vmatprep.subr.mxu0 0.0
  %1537 = vmatpush1.xpose.msra.mxu0 0.0
  %1538 = vmatprep.subr.mxu0 0.0
  %1539 = vmatpush1.xpose.msra.mxu0 0.0
  %1540 = vmatprep.subr.mxu0 0.0
  %1541 = vmatpush1.xpose.msra.mxu0 0.0
  %1542 = vmatprep.subr.mxu0 0.0
  %1543 = vmatpush1.xpose.msra.mxu0 0.0
  %1544 = vmatprep.subr.mxu0 0.0
  %1545 = vmatpush1.xpose.msra.mxu0 0.0
  %1546 = vmatprep.subr.mxu0 0.0
  %1547 = vmatpush1.xpose.msra.mxu0 0.0
  %1548 = vmatprep.subr.mxu0 0.0
  %1549 = vmatpush1.xpose.msra.mxu0 0.0
  %1550 = vmatprep.mubr.f32.mxu0 0.0
  %1551 = vmatmul.mubr.f32.gmra.mrb[0].mxu0 %v1482
  %v1552 = vpop.f32.mrb[0].mxu0
  %v1553 = vadd.f32 0.0, %v1552
  %v1554 = vpop.f32.mrb[0].mxu0
  %1555 = vdwg.mxu0
  %1556 = vrot.lane.b32.xlu0 %v149, 104
  %v1557 = vpop.permute.xlu0 %1556
  %1558 = vrot.lane.b32.xlu0 %v149, 72
  %v1559 = vpop.permute.xlu0 %1558
  %v1560 = vsel %vm251, %v1557, 0
  %v1562 = vsel %vm251, %v1559, 0
  %1564 = vmatprep.subr.mxu0 0.0
  %1565 = vmatpush1.xpose.msra.mxu0 %v1562
  %1566 = vmatprep.subr.mxu0 0.0
  %1567 = vmatpush1.xpose.msra.mxu0 0.0
  %1568 = vmatprep.subr.mxu0 0.0
  %1569 = vmatpush1.xpose.msra.mxu0 0.0
  %1570 = vmatprep.subr.mxu0 0.0
  %1571 = vmatpush1.xpose.msra.mxu0 0.0
  %1572 = vmatprep.subr.mxu0 0.0
  %1573 = vmatpush1.xpose.msra.mxu0 0.0
  %1574 = vmatprep.subr.mxu0 0.0
  %1575 = vmatpush1.xpose.msra.mxu0 0.0
  %1576 = vmatprep.subr.mxu0 0.0
  %1577 = vmatpush1.xpose.msra.mxu0 0.0
  %1578 = vmatprep.subr.mxu0 0.0
  %1579 = vmatpush1.xpose.msra.mxu0 0.0
  %1580 = vmatprep.subr.mxu0 0.0
  %1581 = vmatpush1.xpose.msra.mxu0 0.0
  %1582 = vmatprep.subr.mxu0 0.0
  %1583 = vmatpush1.xpose.msra.mxu0 0.0
  %1584 = vmatprep.subr.mxu0 0.0
  %1585 = vmatpush1.xpose.msra.mxu0 0.0
  %1586 = vmatprep.subr.mxu0 0.0
  %1587 = vmatpush1.xpose.msra.mxu0 0.0
  %1588 = vmatprep.subr.mxu0 0.0
  %1589 = vmatpush1.xpose.msra.mxu0 0.0
  %1590 = vmatprep.subr.mxu0 0.0
  %1591 = vmatpush1.xpose.msra.mxu0 0.0
  %1592 = vmatprep.subr.mxu0 0.0
  %1593 = vmatpush1.xpose.msra.mxu0 0.0
  %1594 = vmatprep.subr.mxu0 0.0
  %1595 = vmatpush1.xpose.msra.mxu0 0.0
  %1596 = vmatprep.subr.mxu0 0.0
  %1597 = vmatpush1.xpose.msra.mxu0 0.0
  %1598 = vmatprep.subr.mxu0 0.0
  %1599 = vmatpush1.xpose.msra.mxu0 0.0
  %1600 = vmatprep.subr.mxu0 0.0
  %1601 = vmatpush1.xpose.msra.mxu0 0.0
  %1602 = vmatprep.subr.mxu0 0.0
  %1603 = vmatpush1.xpose.msra.mxu0 0.0
  %1604 = vmatprep.subr.mxu0 0.0
  %1605 = vmatpush1.xpose.msra.mxu0 0.0
  %1606 = vmatprep.subr.mxu0 0.0
  %1607 = vmatpush1.xpose.msra.mxu0 0.0
  %1608 = vmatprep.subr.mxu0 0.0
  %1609 = vmatpush1.xpose.msra.mxu0 0.0
  %1610 = vmatprep.subr.mxu0 0.0
  %1611 = vmatpush1.xpose.msra.mxu0 0.0
  %1612 = vmatprep.subr.mxu0 0.0
  %1613 = vmatpush1.xpose.msra.mxu0 0.0
  %1614 = vmatprep.subr.mxu0 0.0
  %1615 = vmatpush1.xpose.msra.mxu0 0.0
  %1616 = vmatprep.subr.mxu0 0.0
  %1617 = vmatpush1.xpose.msra.mxu0 0.0
  %1618 = vmatprep.subr.mxu0 0.0
  %1619 = vmatpush1.xpose.msra.mxu0 0.0
  %1620 = vmatprep.subr.mxu0 0.0
  %1621 = vmatpush1.xpose.msra.mxu0 0.0
  %1622 = vmatprep.subr.mxu0 0.0
  %1623 = vmatpush1.xpose.msra.mxu0 0.0
  %1624 = vmatprep.subr.mxu0 0.0
  %1625 = vmatpush1.xpose.msra.mxu0 0.0
  %1626 = vmatprep.subr.mxu0 0.0
  %1627 = vmatpush1.xpose.msra.mxu0 0.0
  %1628 = vmatprep.mubr.f32.mxu0 0.0
  %1629 = vmatmul.mubr.f32.gmra.mrb[0].mxu0 %v1560
  %v1630 = vpop.f32.mrb[0].mxu0
  %v1631 = vadd.f32 0.0, %v1630
  %v1632 = vpop.f32.mrb[0].mxu0
  %1633 = vdwg.mxu0
  %v1634 = vsel %vm251, %v1553, -inf
  %1635 = vmax.xlane.f32.xlu0 %v1634
  %v1636 = vpop.xlane.xlu0 %1635
  %v1637 = vsel %vm251, %v1631, -inf
  %1638 = vmax.xlane.f32.xlu0 %v1637
  %v1639 = vpop.xlane.xlu0 %1638
  %v1640 = vsub.f32 %v1553, %v1636
  %v1641 = vsub.f32 %v1631, %v1639
  %v1642 = vmul.f32 %v1640, 1.442695
  %v1643 = vpow.pop %v1642
  %v1644 = vmul.f32 %v1641, 1.442695
  %v1645 = vpow.pop %v1644
  %v1646 = vsel %vm251, %v1643, 0.0
  %1647 = vadd.xlane.f32.xlu0 %v1646
  %v1648 = vpop.xlane.xlu0 %1647
  %v1649 = vsel %vm251, %v1645, 0.0
  %1650 = vadd.xlane.f32.xlu0 %v1649
  %v1651 = vpop.xlane.xlu0 %1650
  %v1652 = vrcp.pop %v1648
  %v1653 = vrcp.pop %v1651
  %v1654 = vmul.f32 %v1643, %v1652
  %v1655 = vmul.f32 %v1645, %v1653
  %1656 = vrot.lane.b32.xlu0 %v236, 104
  %v1657 = vpop.permute.xlu0 %1656
  %v1660 = vsel %vm251, %v1654, 0
  %1662 = vmatprep.subr.mxu0 0.0
  %1663 = vmatpush1.msra.mxu0 %v1657
  %1664 = vmatprep.subr.mxu0 0.0
  %1665 = vmatpush1.msra.mxu0 0.0
  %1666 = vmatprep.subr.mxu0 0.0
  %1667 = vmatpush1.msra.mxu0 0.0
  %1668 = vmatprep.subr.mxu0 0.0
  %1669 = vmatpush1.msra.mxu0 0.0
  %1670 = vmatprep.subr.mxu0 0.0
  %1671 = vmatpush1.msra.mxu0 0.0
  %1672 = vmatprep.subr.mxu0 0.0
  %1673 = vmatpush1.msra.mxu0 0.0
  %1674 = vmatprep.subr.mxu0 0.0
  %1675 = vmatpush1.msra.mxu0 0.0
  %1676 = vmatprep.subr.mxu0 0.0
  %1677 = vmatpush1.msra.mxu0 0.0
  %1678 = vmatprep.subr.mxu0 0.0
  %1679 = vmatpush1.msra.mxu0 0.0
  %1680 = vmatprep.subr.mxu0 0.0
  %1681 = vmatpush1.msra.mxu0 0.0
  %1682 = vmatprep.subr.mxu0 0.0
  %1683 = vmatpush1.msra.mxu0 0.0
  %1684 = vmatprep.subr.mxu0 0.0
  %1685 = vmatpush1.msra.mxu0 0.0
  %1686 = vmatprep.subr.mxu0 0.0
  %1687 = vmatpush1.msra.mxu0 0.0
  %1688 = vmatprep.subr.mxu0 0.0
  %1689 = vmatpush1.msra.mxu0 0.0
  %1690 = vmatprep.subr.mxu0 0.0
  %1691 = vmatpush1.msra.mxu0 0.0
  %1692 = vmatprep.subr.mxu0 0.0
  %1693 = vmatpush1.msra.mxu0 0.0
  %1694 = vmatprep.subr.mxu0 0.0
  %1695 = vmatpush1.msra.mxu0 0.0
  %1696 = vmatprep.subr.mxu0 0.0
  %1697 = vmatpush1.msra.mxu0 0.0
  %1698 = vmatprep.subr.mxu0 0.0
  %1699 = vmatpush1.msra.mxu0 0.0
  %1700 = vmatprep.subr.mxu0 0.0
  %1701 = vmatpush1.msra.mxu0 0.0
  %1702 = vmatprep.subr.mxu0 0.0
  %1703 = vmatpush1.msra.mxu0 0.0
  %1704 = vmatprep.subr.mxu0 0.0
  %1705 = vmatpush1.msra.mxu0 0.0
  %1706 = vmatprep.subr.mxu0 0.0
  %1707 = vmatpush1.msra.mxu0 0.0
  %1708 = vmatprep.subr.mxu0 0.0
  %1709 = vmatpush1.msra.mxu0 0.0
  %1710 = vmatprep.subr.mxu0 0.0
  %1711 = vmatpush1.msra.mxu0 0.0
  %1712 = vmatprep.subr.mxu0 0.0
  %1713 = vmatpush1.msra.mxu0 0.0
  %1714 = vmatprep.subr.mxu0 0.0
  %1715 = vmatpush1.msra.mxu0 0.0
  %1716 = vmatprep.subr.mxu0 0.0
  %1717 = vmatpush1.msra.mxu0 0.0
  %1718 = vmatprep.subr.mxu0 0.0
  %1719 = vmatpush1.msra.mxu0 0.0
  %1720 = vmatprep.subr.mxu0 0.0
  %1721 = vmatpush1.msra.mxu0 0.0
  %1722 = vmatprep.subr.mxu0 0.0
  %1723 = vmatpush1.msra.mxu0 0.0
  %1724 = vmatprep.subr.mxu0 0.0
  %1725 = vmatpush1.msra.mxu0 0.0
  %1726 = vmatprep.mubr.f32.mxu0 0.0
  %1727 = vmatmul.mubr.f32.gmra.mrb[0].mxu0 %v1660
  %v1728 = vpop.f32.mrb[0].mxu0
  %v1729 = vadd.f32 0.0, %v1728
  %v1730 = vpop.f32.mrb[0].mxu0
  %1731 = vdwg.mxu0
  %1732 = vrot.lane.b32.xlu0 %v241, 104
  %v1733 = vpop.permute.xlu0 %1732
  %v1736 = vsel %vm251, %v1655, 0
  %1738 = vmatprep.subr.mxu0 0.0
  %1739 = vmatpush1.msra.mxu0 %v1733
  %1740 = vmatprep.subr.mxu0 0.0
  %1741 = vmatpush1.msra.mxu0 0.0
  %1742 = vmatprep.subr.mxu0 0.0
  %1743 = vmatpush1.msra.mxu0 0.0
  %1744 = vmatprep.subr.mxu0 0.0
  %1745 = vmatpush1.msra.mxu0 0.0
  %1746 = vmatprep.subr.mxu0 0.0
  %1747 = vmatpush1.msra.mxu0 0.0
  %1748 = vmatprep.subr.mxu0 0.0
  %1749 = vmatpush1.msra.mxu0 0.0
  %1750 = vmatprep.subr.mxu0 0.0
  %1751 = vmatpush1.msra.mxu0 0.0
  %1752 = vmatprep.subr.mxu0 0.0
  %1753 = vmatpush1.msra.mxu0 0.0
  %1754 = vmatprep.subr.mxu0 0.0
  %1755 = vmatpush1.msra.mxu0 0.0
  %1756 = vmatprep.subr.mxu0 0.0
  %1757 = vmatpush1.msra.mxu0 0.0
  %1758 = vmatprep.subr.mxu0 0.0
  %1759 = vmatpush1.msra.mxu0 0.0
  %1760 = vmatprep.subr.mxu0 0.0
  %1761 = vmatpush1.msra.mxu0 0.0
  %1762 = vmatprep.subr.mxu0 0.0
  %1763 = vmatpush1.msra.mxu0 0.0
  %1764 = vmatprep.subr.mxu0 0.0
  %1765 = vmatpush1.msra.mxu0 0.0
  %1766 = vmatprep.subr.mxu0 0.0
  %1767 = vmatpush1.msra.mxu0 0.0
  %1768 = vmatprep.subr.mxu0 0.0
  %1769 = vmatpush1.msra.mxu0 0.0
  %1770 = vmatprep.subr.mxu0 0.0
  %1771 = vmatpush1.msra.mxu0 0.0
  %1772 = vmatprep.subr.mxu0 0.0
  %1773 = vmatpush1.msra.mxu0 0.0
  %1774 = vmatprep.subr.mxu0 0.0
  %1775 = vmatpush1.msra.mxu0 0.0
  %1776 = vmatprep.subr.mxu0 0.0
  %1777 = vmatpush1.msra.mxu0 0.0
  %1778 = vmatprep.subr.mxu0 0.0
  %1779 = vmatpush1.msra.mxu0 0.0
  %1780 = vmatprep.subr.mxu0 0.0
  %1781 = vmatpush1.msra.mxu0 0.0
  %1782 = vmatprep.subr.mxu0 0.0
  %1783 = vmatpush1.msra.mxu0 0.0
  %1784 = vmatprep.subr.mxu0 0.0
  %1785 = vmatpush1.msra.mxu0 0.0
  %1786 = vmatprep.subr.mxu0 0.0
  %1787 = vmatpush1.msra.mxu0 0.0
  %1788 = vmatprep.subr.mxu0 0.0
  %1789 = vmatpush1.msra.mxu0 0.0
  %1790 = vmatprep.subr.mxu0 0.0
  %1791 = vmatpush1.msra.mxu0 0.0
  %1792 = vmatprep.subr.mxu0 0.0
  %1793 = vmatpush1.msra.mxu0 0.0
  %1794 = vmatprep.subr.mxu0 0.0
  %1795 = vmatpush1.msra.mxu0 0.0
  %1796 = vmatprep.subr.mxu0 0.0
  %1797 = vmatpush1.msra.mxu0 0.0
  %1798 = vmatprep.subr.mxu0 0.0
  %1799 = vmatpush1.msra.mxu0 0.0
  %1800 = vmatprep.subr.mxu0 0.0
  %1801 = vmatpush1.msra.mxu0 0.0
  %1802 = vmatprep.mubr.f32.mxu0 0.0
  %1803 = vmatmul.mubr.f32.gmra.mrb[0].mxu0 %v1736
  %v1804 = vpop.f32.mrb[0].mxu0
  %v1805 = vadd.f32 0.0, %v1804
  %v1806 = vpop.f32.mrb[0].mxu0
  %1807 = vdwg.mxu0
  %v1809 = vsel %vm251, %v1729, 0
  %v1812 = vsel %vm251, %v1805, 0
  %1814 = vmatprep.subr.mxu0 0.0
  %1815 = vmatpush1.msra.mxu0 %v247
  %1816 = vmatprep.subr.mxu0 0.0
  %1817 = vmatpush1.msra.mxu0 0.0
  %1818 = vmatprep.subr.mxu0 0.0
  %1819 = vmatpush1.msra.mxu0 0.0
  %1820 = vmatprep.subr.mxu0 0.0
  %1821 = vmatpush1.msra.mxu0 0.0
  %1822 = vmatprep.subr.mxu0 0.0
  %1823 = vmatpush1.msra.mxu0 0.0
  %1824 = vmatprep.subr.mxu0 0.0
  %1825 = vmatpush1.msra.mxu0 0.0
  %1826 = vmatprep.subr.mxu0 0.0
  %1827 = vmatpush1.msra.mxu0 0.0
  %1828 = vmatprep.subr.mxu0 0.0
  %1829 = vmatpush1.msra.mxu0 0.0
  %1830 = vmatprep.subr.mxu0 0.0
  %1831 = vmatpush1.msra.mxu0 0.0
  %1832 = vmatprep.subr.mxu0 0.0
  %1833 = vmatpush1.msra.mxu0 0.0
  %1834 = vmatprep.subr.mxu0 0.0
  %1835 = vmatpush1.msra.mxu0 0.0
  %1836 = vmatprep.subr.mxu0 0.0
  %1837 = vmatpush1.msra.mxu0 0.0
  %1838 = vmatprep.subr.mxu0 0.0
  %1839 = vmatpush1.msra.mxu0 0.0
  %1840 = vmatprep.subr.mxu0 0.0
  %1841 = vmatpush1.msra.mxu0 0.0
  %1842 = vmatprep.subr.mxu0 0.0
  %1843 = vmatpush1.msra.mxu0 0.0
  %1844 = vmatprep.subr.mxu0 0.0
  %1845 = vmatpush1.msra.mxu0 0.0
  %1846 = vmatprep.subr.mxu0 0.0
  %1847 = vmatpush1.msra.mxu0 0.0
  %1848 = vmatprep.subr.mxu0 0.0
  %1849 = vmatpush1.msra.mxu0 0.0
  %1850 = vmatprep.subr.mxu0 0.0
  %1851 = vmatpush1.msra.mxu0 0.0
  %1852 = vmatprep.subr.mxu0 0.0
  %1853 = vmatpush1.msra.mxu0 0.0
  %1854 = vmatprep.subr.mxu0 0.0
  %1855 = vmatpush1.msra.mxu0 0.0
  %1856 = vmatprep.subr.mxu0 0.0
  %1857 = vmatpush1.msra.mxu0 0.0
  %1858 = vmatprep.subr.mxu0 0.0
  %1859 = vmatpush1.msra.mxu0 0.0
  %1860 = vmatprep.subr.mxu0 0.0
  %1861 = vmatpush1.msra.mxu0 0.0
  %1862 = vmatprep.subr.mxu0 0.0
  %1863 = vmatpush1.msra.mxu0 0.0
  %1864 = vmatprep.subr.mxu0 0.0
  %1865 = vmatpush1.msra.mxu0 0.0
  %1866 = vmatprep.subr.mxu0 0.0
  %1867 = vmatpush1.msra.mxu0 0.0
  %1868 = vmatprep.subr.mxu0 0.0
  %1869 = vmatpush1.msra.mxu0 0.0
  %1870 = vmatprep.subr.mxu0 0.0
  %1871 = vmatpush1.msra.mxu0 0.0
  %1872 = vmatprep.subr.mxu0 0.0
  %1873 = vmatpush1.msra.mxu0 0.0
  %1874 = vmatprep.subr.mxu0 0.0
  %1875 = vmatpush1.msra.mxu0 0.0
  %1876 = vmatprep.subr.mxu0 0.0
  %1877 = vmatpush1.msra.mxu0 0.0
  %1878 = vmatprep.mubr.f32.mxu0 0.0
  %1879 = vmatmul.mubr.f32.gmra.mrb[0].mxu0 %v1809
  %v1880 = vpop.f32.mrb[0].mxu0
  %v1881 = vadd.f32 0.0, %v1880
  %v1882 = vpop.f32.mrb[0].mxu0
  %1883 = vmatprep.mubr.f32.mxu0 0.0
  %1884 = vmatmul.mubr.f32.gmra.mrb[0].mxu0 %v1812
  %v1885 = vpop.f32.mrb[0].mxu0
  %v1886 = vadd.f32 0.0, %v1885
  %v1887 = vpop.f32.mrb[0].mxu0
  %1888 = vdwg.mxu0
  %v1889 = vadd.f32 %v1476, %v1881
  %v1890 = vadd.f32 %v1477, %v1886
  %v1891 = vld [vmem:[%s7] sm:$0x1]
  %v1893 = vlaneseq
  %v1894 = vshrl.u32 %v1893, 7
  %v1895 = vsub.s32 0, %v1894
  %v1896 = vrot.slane %v1891, %v1895
  %v1898 = vadd.f32 %v1889, %v1896
  %v1899 = vadd.f32 %v1890, %v1896
  %v1900 = vadd.f32 %v53, %v1898
  %v1901 = vadd.f32 %v54, %v1899
  %v1902 = vld [vmem:[%s8] sm:$0x1]
  %v1903 = vld [vmem:[%s9] sm:$0x1]
  %v1904 = vsel %vm70, %v1900, 0.0
  %1905 = vadd.xlane.f32.xlu0 %v1904
  %v1906 = vpop.xlane.xlu0 %1905
  %v1907 = vsel %vm70, %v1901, 0.0
  %1908 = vadd.xlane.f32.xlu0 %v1907
  %v1909 = vpop.xlane.xlu0 %1908
  %v1910 = vrcp.pop 32.0
  %v1911 = vmul.f32 %v1906, %v1910
  %v1912 = vmul.f32 %v1909, %v1910
  %v1913 = vsub.f32 %v1900, %v1911
  %v1914 = vsub.f32 %v1901, %v1912
  %v1915 = vmul.f32 %v1913, %v1913
  %v1916 = vmul.f32 %v1914, %v1914
  %v1917 = vsel %vm70, %v1915, 0.0
  %1918 = vadd.xlane.f32.xlu0 %v1917
  %v1919 = vpop.xlane.xlu0 %1918
  %v1920 = vsel %vm70, %v1916, 0.0
  %1921 = vadd.xlane.f32.xlu0 %v1920
  %v1922 = vpop.xlane.xlu0 %1921
  %v1923 = vmul.f32 %v1919, %v1910
  %v1924 = vmul.f32 %v1922, %v1910
  %v1925 = vadd.f32 %v1923, 1e-05
  %v1926 = vadd.f32 %v1924, 1e-05
  %v1927 = vrsqrt.pop %v1925
  %v1928 = vrsqrt.pop %v1926
  %v1929 = vmul.f32 %v1913, %v1927
  %v1930 = vmul.f32 %v1914, %v1928
  %v1932 = vlaneseq
  %v1933 = vshrl.u32 %v1932, 7
  %v1934 = vsub.s32 0, %v1933
  %v1935 = vrot.slane %v1902, %v1934
  %v1937 = vmul.f32 %v1929, %v1935
  %v1938 = vmul.f32 %v1930, %v1935
  %v1940 = vlaneseq
  %v1941 = vshrl.u32 %v1940, 7
  %v1942 = vsub.s32 0, %v1941
  %v1943 = vrot.slane %v1903, %v1942
  %v1945 = vadd.f32 %v1937, %v1943
  %v1946 = vadd.f32 %v1938, %v1943
  %v1947 = vld [vmem:[%s12] sm:$0xff]
  %v1948 = vld [vmem:[%s12 + $0x8] sm:$0xff]
  %v1949 = vld [vmem:[%s12 + $0x10] sm:$0xff]
  %v1950 = vld [vmem:[%s12 + $0x18] sm:$0xff]
  %v1951 = vld [vmem:[%s13] sm:$0x1]
  %v1953 = vlaneseq
  %v1954 = vshrl.u32 %v1953, 7
  %v1955 = vsub.s32 0, %v1954
  %v1956 = vrot.slane %v1951, %v1955
  %v1959 = vsel %vm70, %v1945, 0
  %v1962 = vsel %vm70, %v1946, 0
  %1964 = vmatprep.subr.mxu0 0.0
  %1965 = vmatpush1.msra.mxu0 %v1947
  %1966 = vmatprep.subr.mxu0 0.0
  %1967 = vmatpush1.msra.mxu0 %v1948
  %1968 = vmatprep.subr.mxu0 0.0
  %1969 = vmatpush1.msra.mxu0 %v1949
  %1970 = vmatprep.subr.mxu0 0.0
  %1971 = vmatpush1.msra.mxu0 %v1950
  %1972 = vmatprep.subr.mxu0 0.0
  %1973 = vmatpush1.msra.mxu0 0.0
  %1974 = vmatprep.subr.mxu0 0.0
  %1975 = vmatpush1.msra.mxu0 0.0
  %1976 = vmatprep.subr.mxu0 0.0
  %1977 = vmatpush1.msra.mxu0 0.0
  %1978 = vmatprep.subr.mxu0 0.0
  %1979 = vmatpush1.msra.mxu0 0.0
  %1980 = vmatprep.subr.mxu0 0.0
  %1981 = vmatpush1.msra.mxu0 0.0
  %1982 = vmatprep.subr.mxu0 0.0
  %1983 = vmatpush1.msra.mxu0 0.0
  %1984 = vmatprep.subr.mxu0 0.0
  %1985 = vmatpush1.msra.mxu0 0.0
  %1986 = vmatprep.subr.mxu0 0.0
  %1987 = vmatpush1.msra.mxu0 0.0
  %1988 = vmatprep.subr.mxu0 0.0
  %1989 = vmatpush1.msra.mxu0 0.0
  %1990 = vmatprep.subr.mxu0 0.0
  %1991 = vmatpush1.msra.mxu0 0.0
  %1992 = vmatprep.subr.mxu0 0.0
  %1993 = vmatpush1.msra.mxu0 0.0
  %1994 = vmatprep.subr.mxu0 0.0
  %1995 = vmatpush1.msra.mxu0 0.0
  %1996 = vmatprep.subr.mxu0 0.0
  %1997 = vmatpush1.msra.mxu0 0.0
  %1998 = vmatprep.subr.mxu0 0.0
  %1999 = vmatpush1.msra.mxu0 0.0
  %2000 = vmatprep.subr.mxu0 0.0
  %2001 = vmatpush1.msra.mxu0 0.0
  %2002 = vmatprep.subr.mxu0 0.0
  %2003 = vmatpush1.msra.mxu0 0.0
  %2004 = vmatprep.subr.mxu0 0.0
  %2005 = vmatpush1.msra.mxu0 0.0
  %2006 = vmatprep.subr.mxu0 0.0
  %2007 = vmatpush1.msra.mxu0 0.0
  %2008 = vmatprep.subr.mxu0 0.0
  %2009 = vmatpush1.msra.mxu0 0.0
  %2010 = vmatprep.subr.mxu0 0.0
  %2011 = vmatpush1.msra.mxu0 0.0
  %2012 = vmatprep.subr.mxu0 0.0
  %2013 = vmatpush1.msra.mxu0 0.0
  %2014 = vmatprep.subr.mxu0 0.0
  %2015 = vmatpush1.msra.mxu0 0.0
  %2016 = vmatprep.subr.mxu0 0.0
  %2017 = vmatpush1.msra.mxu0 0.0
  %2018 = vmatprep.subr.mxu0 0.0
  %2019 = vmatpush1.msra.mxu0 0.0
  %2020 = vmatprep.subr.mxu0 0.0
  %2021 = vmatpush1.msra.mxu0 0.0
  %2022 = vmatprep.subr.mxu0 0.0
  %2023 = vmatpush1.msra.mxu0 0.0
  %2024 = vmatprep.subr.mxu0 0.0
  %2025 = vmatpush1.msra.mxu0 0.0
  %2026 = vmatprep.subr.mxu0 0.0
  %2027 = vmatpush1.msra.mxu0 0.0
  %2028 = vmatprep.mubr.f32.mxu0 0.0
  %2029 = vmatmul.mubr.f32.gmra.mrb[0].mxu0 %v1959
  %v2030 = vpop.f32.mrb[0].mxu0
  %v2031 = vadd.f32 %v1956, %v2030
  %v2032 = vpop.f32.mrb[0].mxu0
  %2033 = vmatprep.mubr.f32.mxu0 0.0
  %2034 = vmatmul.mubr.f32.gmra.mrb[0].mxu0 %v1962
  %v2035 = vpop.f32.mrb[0].mxu0
  %v2036 = vadd.f32 %v1956, %v2035
  %v2037 = vpop.f32.mrb[0].mxu0
  %2038 = vdwg.mxu0
  %v2039 = vmax.f32 %v2031, 0.0
  %v2040 = vmax.f32 %v2036, 0.0
  %v2041 = vld [vmem:[%s14] sm:$0xff]
  %v2042 = vld [vmem:[%s14 + $0x8] sm:$0xff]
  %v2043 = vld [vmem:[%s14 + $0x10] sm:$0xff]
  %v2044 = vld [vmem:[%s14 + $0x18] sm:$0xff]
  %v2045 = vld [vmem:[%s14 + $0x20] sm:$0xff]
  %v2046 = vld [vmem:[%s14 + $0x28] sm:$0xff]
  %v2047 = vld [vmem:[%s14 + $0x30] sm:$0xff]
  %v2048 = vld [vmem:[%s14 + $0x38] sm:$0xff]
  %v2049 = vld [vmem:[%s15] sm:$0x1]
  %v2051 = vlaneseq
  %v2052 = vshrl.u32 %v2051, 7
  %v2053 = vsub.s32 0, %v2052
  %v2054 = vrot.slane %v2049, %v2053
  %vm2056 = vcmask 523264
  %v2058 = vsel %vm2056, %v2039, 0
  %v2061 = vsel %vm2056, %v2040, 0
  %2063 = vmatprep.subr.mxu0 0.0
  %2064 = vmatpush1.msra.mxu0 %v2041
  %2065 = vmatprep.subr.mxu0 0.0
  %2066 = vmatpush1.msra.mxu0 %v2042
  %2067 = vmatprep.subr.mxu0 0.0
  %2068 = vmatpush1.msra.mxu0 %v2043
  %2069 = vmatprep.subr.mxu0 0.0
  %2070 = vmatpush1.msra.mxu0 %v2044
  %2071 = vmatprep.subr.mxu0 0.0
  %2072 = vmatpush1.msra.mxu0 %v2045
  %2073 = vmatprep.subr.mxu0 0.0
  %2074 = vmatpush1.msra.mxu0 %v2046
  %2075 = vmatprep.subr.mxu0 0.0
  %2076 = vmatpush1.msra.mxu0 %v2047
  %2077 = vmatprep.subr.mxu0 0.0
  %2078 = vmatpush1.msra.mxu0 %v2048
  %2079 = vmatprep.subr.mxu0 0.0
  %2080 = vmatpush1.msra.mxu0 0.0
  %2081 = vmatprep.subr.mxu0 0.0
  %2082 = vmatpush1.msra.mxu0 0.0
  %2083 = vmatprep.subr.mxu0 0.0
  %2084 = vmatpush1.msra.mxu0 0.0
  %2085 = vmatprep.subr.mxu0 0.0
  %2086 = vmatpush1.msra.mxu0 0.0
  %2087 = vmatprep.subr.mxu0 0.0
  %2088 = vmatpush1.msra.mxu0 0.0
  %2089 = vmatprep.subr.mxu0 0.0
  %2090 = vmatpush1.msra.mxu0 0.0
  %2091 = vmatprep.subr.mxu0 0.0
  %2092 = vmatpush1.msra.mxu0 0.0
  %2093 = vmatprep.subr.mxu0 0.0
  %2094 = vmatpush1.msra.mxu0 0.0
  %2095 = vmatprep.subr.mxu0 0.0
  %2096 = vmatpush1.msra.mxu0 0.0
  %2097 = vmatprep.subr.mxu0 0.0
  %2098 = vmatpush1.msra.mxu0 0.0
  %2099 = vmatprep.subr.mxu0 0.0
  %2100 = vmatpush1.msra.mxu0 0.0
  %2101 = vmatprep.subr.mxu0 0.0
  %2102 = vmatpush1.msra.mxu0 0.0
  %2103 = vmatprep.subr.mxu0 0.0
  %2104 = vmatpush1.msra.mxu0 0.0
  %2105 = vmatprep.subr.mxu0 0.0
  %2106 = vmatpush1.msra.mxu0 0.0
  %2107 = vmatprep.subr.mxu0 0.0
  %2108 = vmatpush1.msra.mxu0 0.0
  %2109 = vmatprep.subr.mxu0 0.0
  %2110 = vmatpush1.msra.mxu0 0.0
  %2111 = vmatprep.subr.mxu0 0.0
  %2112 = vmatpush1.msra.mxu0 0.0
  %2113 = vmatprep.subr.mxu0 0.0
  %2114 = vmatpush1.msra.mxu0 0.0
  %2115 = vmatprep.subr.mxu0 0.0
  %2116 = vmatpush1.msra.mxu0 0.0
  %2117 = vmatprep.subr.mxu0 0.0
  %2118 = vmatpush1.msra.mxu0 0.0
  %2119 = vmatprep.subr.mxu0 0.0
  %2120 = vmatpush1.msra.mxu0 0.0
  %2121 = vmatprep.subr.mxu0 0.0
  %2122 = vmatpush1.msra.mxu0 0.0
  %2123 = vmatprep.subr.mxu0 0.0
  %2124 = vmatpush1.msra.mxu0 0.0
  %2125 = vmatprep.subr.mxu0 0.0
  %2126 = vmatpush1.msra.mxu0 0.0
  %2127 = vmatprep.mubr.f32.mxu0 0.0
  %2128 = vmatmul.mubr.f32.gmra.mrb[0].mxu0 %v2058
  %v2129 = vpop.f32.mrb[0].mxu0
  %v2130 = vadd.f32 %v2054, %v2129
  %v2131 = vpop.f32.mrb[0].mxu0
  %2132 = vmatprep.mubr.f32.mxu0 0.0
  %2133 = vmatmul.mubr.f32.gmra.mrb[0].mxu0 %v2061
  %v2134 = vpop.f32.mrb[0].mxu0
  %v2135 = vadd.f32 %v2054, %v2134
  %v2136 = vpop.f32.mrb[0].mxu0
  %2137 = vdwg.mxu0
  %v2138 = vadd.f32 %v1945, %v2130
  %v2139 = vadd.f32 %v1946, %v2135
  %v2140 = vld [vmem:[%s10] sm:$0x1]
  %v2141 = vld [vmem:[%s11] sm:$0x1]
  %v2142 = vsel %vm70, %v2138, 0.0
  %2143 = vadd.xlane.f32.xlu0 %v2142
  %v2144 = vpop.xlane.xlu0 %2143
  %v2145 = vsel %vm70, %v2139, 0.0
  %2146 = vadd.xlane.f32.xlu0 %v2145
  %v2147 = vpop.xlane.xlu0 %2146
  %v2148 = vmul.f32 %v2144, %v1910
  %v2149 = vmul.f32 %v2147, %v1910
  %v2150 = vsub.f32 %v2138, %v2148
  %v2151 = vsub.f32 %v2139, %v2149
  %v2152 = vmul.f32 %v2150, %v2150
  %v2153 = vmul.f32 %v2151, %v2151
  %v2154 = vsel %vm70, %v2152, 0.0
  %2155 = vadd.xlane.f32.xlu0 %v2154
  %v2156 = vpop.xlane.xlu0 %2155
  %v2157 = vsel %vm70, %v2153, 0.0
  %2158 = vadd.xlane.f32.xlu0 %v2157
  %v2159 = vpop.xlane.xlu0 %2158
  %v2160 = vmul.f32 %v2156, %v1910
  %v2161 = vmul.f32 %v2159, %v1910
  %v2162 = vadd.f32 %v2160, 1e-05
  %v2163 = vadd.f32 %v2161, 1e-05
  %v2164 = vrsqrt.pop %v2162
  %v2165 = vrsqrt.pop %v2163
  %v2166 = vmul.f32 %v2150, %v2164
  %v2167 = vmul.f32 %v2151, %v2165
  %v2169 = vlaneseq
  %v2170 = vshrl.u32 %v2169, 7
  %v2171 = vsub.s32 0, %v2170
  %v2172 = vrot.slane %v2140, %v2171
  %v2174 = vmul.f32 %v2166, %v2172
  %v2175 = vmul.f32 %v2167, %v2172
  %v2177 = vlaneseq
  %v2178 = vshrl.u32 %v2177, 7
  %v2179 = vsub.s32 0, %v2178
  %v2180 = vrot.slane %v2141, %v2179
  %v2182 = vadd.f32 %v2174, %v2180
  %v2183 = vadd.f32 %v2175, %v2180
  %2184 = vst.msk [vmem:[%s16] sm:$0xff] %vm70, %v2182
  %2185 = vst.msk [vmem:[%s16 + $0x8] sm:$0xff] %vm70, %v2183
  // Predicated region
  $region66: #{transformer_encoder_layer.1} parent=0 // pred_check
    _
  $region67: #{transformer_encoder_layer.1} parent=0 // pred_check_branch
    %2187 = sbr.rel (0) target = $region69
  $region68: #{transformer_encoder_layer.1} parent=0 // pred_region
    _
  $region69: #{transformer_encoder_layer.1} parent=0 // pred_fallthru
    _
  // Predicated region
  $region70: #{transformer_encoder_layer.1} parent=0 // pred_check
    _
  $region71: #{transformer_encoder_layer.1} parent=0 // pred_check_branch
    %2189 = sbr.rel (0) target = $region73
  $region72: #{transformer_encoder_layer.1} parent=0 // pred_region
    _
  $region73: #{transformer_encoder_layer.1} parent=0 // pred_fallthru
    _

</llo_original>
